<compile_context>
chip_gen: v5e
topology: v5e:2x2
jax: 0.10.0
libtpu: 0.0.40
codegen_flags: <defaults>
</compile_context>

<pallas_src>
import jax
import jax.numpy as jnp
from jax import lax
from jax.experimental import pallas as pl
from jax.experimental.pallas import tpu as pltpu

K_PROJ = 30        # projector[:, :30]
K_NEIGHBORS = 15   # torch.topk(..., 15, largest=False)
NUM_CLASSES = 10


def knn_kernel(x_ref, p_ref, psum_ref, data_ref, dsq_ref, labels_ref, out_ref):
    # --- project queries, folding (x - mean) / ||x - mean|| into the matmul ---
    x = x_ref[...].astype(jnp.float32)                                   # [B, D]
    d_feat = x.shape[1]
    row_sum = jnp.sum(x, axis=1, keepdims=True)                          # [B, 1]
    row_mean = row_sum * (1.0 / d_feat)                                  # [B, 1]
    row_sumsq = jnp.sum(x * x, axis=1, keepdims=True)                    # [B, 1]
    inv_norm = lax.rsqrt(row_sumsq - d_feat * row_mean * row_mean)       # [B, 1]

    xp = jnp.dot(x, p_ref[...], preferred_element_type=jnp.float32)      # [B, 30]
    # (x - m) @ P = x @ P - m * colsum(P)
    q = (xp - row_mean * psum_ref[...]) * inv_norm                       # [B, 30]

    data = data_ref[...]                                                 # [N, 30]
    n = data.shape[0]
    b = q.shape[0]

    # --- pairwise squared Euclidean distance, lane-dense [B, N] ---
    q_sq = jnp.sum(q * q, axis=1, keepdims=True)                         # [B, 1]
    cross = lax.dot_general(q, data, (((1,), (1,)), ((), ())),
                            preferred_element_type=jnp.float32)          # [B, N]
    d2 = jnp.maximum(dsq_ref[...] + q_sq - 2.0 * cross, 0.0)             # [B, N]

    # --- hoisted neighbor weights: exp(-dist), computed once ---
    e = jnp.exp(-jnp.sqrt(d2))                                           # [B, N]

    # --- top-15 smallest per row (per query) via masked argmin passes ---
    iota_n = lax.broadcasted_iota(jnp.int32, (b, n), 1)                  # lane index

    def body(_, carry):
        dcur, w = carry
        row_min = jnp.min(dcur, axis=1, keepdims=True)                   # [B, 1]
        is_min = dcur == row_min
        idx = jnp.min(jnp.where(is_min, iota_n, n), axis=1,
                      keepdims=True)                                     # lowest index wins ties
        sel = iota_n == idx                                              # exact one-hot per row
        w = w + jnp.where(sel, e, 0.0)                                   # weight exp(-dist)
        dcur = jnp.where(sel, jnp.inf, dcur)                             # exclude next pass
        return dcur, w

    _, w = lax.fori_loop(0, K_NEIGHBORS, body,
                         (d2, jnp.zeros_like(d2)), unroll=True)

    # --- out[j, c] = log( sum_i w[j, i] * labels[i, c] ) ---
    acc = jnp.dot(w, labels_ref[...], preferred_element_type=jnp.float32)  # [B, 10]
    out_ref[...] = jnp.log(acc)


def knn_forward(x_img, projector30, data, labels):
    b = x_img.shape[0]
    x = x_img.reshape(b, -1).astype(jnp.float32)
    # Init-time constants (free host-side precompute).
    proj_colsum = jnp.sum(projector30, axis=0, keepdims=True)            # [1, 30]
    data_sq = jnp.sum(data * data, axis=1, keepdims=True).T              # [1, N]
    vmem = pl.BlockSpec(memory_space=pltpu.MemorySpace.VMEM)
    return pl.pallas_call(
        knn_kernel,
        out_shape=jax.ShapeDtypeStruct((b, NUM_CLASSES), jnp.float32),
        in_specs=[vmem] * 6,
        out_specs=vmem,
    )(x, projector30, proj_colsum, data, data_sq, labels)


def knn_reference(x_img, projector30, data, labels):
    """Pure-JAX reference mirroring the PyTorch forward semantics."""
    x = x_img.reshape(x_img.shape[0], -1).astype(jnp.float32)
    x = x - jnp.mean(x, axis=1, keepdims=True)
    x = x / jnp.linalg.norm(x, axis=-1, keepdims=True)
    q = x @ projector30                                                   # [B, 30]
    d2 = (jnp.sum(data * data, -1)[:, None] + jnp.sum(q * q, -1)[None, :]
          - 2.0 * data @ q.T)
    cdist = jnp.sqrt(jnp.maximum(d2, 0.0))                                # [N, B]
    neg_d, idx = lax.top_k(-cdist.T, K_NEIGHBORS)                         # per query
    gdist = -neg_d                                                        # [B, 15]
    lab = labels[idx]                                                     # [B, 15, 10]
    return jnp.log(jnp.sum(lab * jnp.exp(-gdist)[..., None], axis=1))


if __name__ == "__main__":
    key = jax.random.PRNGKey(0)
    B, C, H, W = 8, 3, 16, 16          # small CIFAR-like queries
    D = C * H * W                      # 768
    N = 256                            # synthetic "training set" size

    k_raw, k_lab, k_x = jax.random.split(key, 3)

    # __init__: raw training data, globally centered, row-normalized; one-hot labels.
    raw = jax.random.normal(k_raw, (N, D), dtype=jnp.float32)
    raw = raw - jnp.mean(raw)
    raw = raw / jnp.linalg.norm(raw, axis=-1, keepdims=True)
    raw_labels = jax.random.randint(k_lab, (N,), 0, NUM_CLASSES)
    labels = jax.nn.one_hot(raw_labels, NUM_CLASSES, dtype=jnp.float32)

    # init(): projector = V from SVD(raw); data = raw @ V[:, :30]
    # TODO(synk): SVD stays as host-side JAX glue (one-time parameter setup, not the hot path).
    _, _, vt = jnp.linalg.svd(raw, full_matrices=False)
    projector30 = vt.T[:, :K_PROJ]                                        # [D, 30]
    data = raw @ projector30                                              # [N, 30]

    x_img = jax.random.normal(k_x, (B, C, H, W), dtype=jnp.float32)

    out = jax.block_until_ready(knn_forward(x_img, projector30, data, labels))
    ref = knn_reference(x_img, projector30, data, labels)

    assert out.shape == (B, NUM_CLASSES)
    assert bool(jnp.allclose(out, ref, rtol=1e-2, atol=1e-2))
    print("KERNEL_OK")
</pallas_src>

<mosaic_0001>
module attributes {stable_mosaic.version = 11 : i64} {
  func.func @knn_kernel(%arg0: memref<8x768xf32, #tpu.memory_space<vmem>>, %arg1: memref<768x30xf32, #tpu.memory_space<vmem>>, %arg2: memref<1x30xf32, #tpu.memory_space<vmem>>, %arg3: memref<256x30xf32, #tpu.memory_space<vmem>>, %arg4: memref<1x256xf32, #tpu.memory_space<vmem>>, %arg5: memref<256x10xf32, #tpu.memory_space<vmem>>, %arg6: memref<8x10xf32, #tpu.memory_space<vmem>>) attributes {dimension_semantics = [], scalar_prefetch = 0 : i64, scratch_operands = 0 : i64, tpu.core_type = #tpu.core_type<tc>} {
    %c0 = arith.constant 0 : index
    %c0_0 = arith.constant 0 : index
    %0 = vector.load %arg0[%c0, %c0_0] : memref<8x768xf32, #tpu.memory_space<vmem>>, vector<8x768xf32>
    %cst = arith.constant dense<0.000000e+00> : vector<8xf32>
    %1 = vector.multi_reduction <add>, %0, %cst [1] : vector<8x768xf32> to vector<8xf32>
    %2 = vector.shape_cast %1 : vector<8xf32> to vector<8x1xf32>
    %cst_1 = arith.constant 0.00130208337 : f32
    %3 = vector.broadcast %cst_1 : f32 to vector<8x1xf32>
    %4 = arith.mulf %2, %3 : vector<8x1xf32>
    %5 = arith.mulf %0, %0 : vector<8x768xf32>
    %cst_2 = arith.constant dense<0.000000e+00> : vector<8xf32>
    %6 = vector.multi_reduction <add>, %5, %cst_2 [1] : vector<8x768xf32> to vector<8xf32>
    %7 = vector.shape_cast %6 : vector<8xf32> to vector<8x1xf32>
    %cst_3 = arith.constant 7.680000e+02 : f32
    %8 = vector.broadcast %cst_3 : f32 to vector<8x1xf32>
    %9 = arith.mulf %8, %4 : vector<8x1xf32>
    %10 = arith.mulf %9, %4 : vector<8x1xf32>
    %11 = arith.subf %7, %10 : vector<8x1xf32>
    %12 = math.rsqrt %11 : vector<8x1xf32>
    %c0_4 = arith.constant 0 : index
    %c0_5 = arith.constant 0 : index
    %13 = vector.load %arg1[%c0_4, %c0_5] : memref<768x30xf32, #tpu.memory_space<vmem>>, vector<768x30xf32>
    %cst_6 = arith.constant dense<0.000000e+00> : vector<8x30xf32>
    %14 = tpu.matmul %0, %13, %cst_6 {dimension_numbers = #tpu.dot_dimension_numbers<[1], [0], [0], [1], [0, 0, 1, 1], [], []>} : vector<8x768xf32>, vector<768x30xf32>, vector<8x30xf32> -> vector<8x30xf32>
    %c0_7 = arith.constant 0 : index
    %c0_8 = arith.constant 0 : index
    %15 = vector.load %arg2[%c0_7, %c0_8] : memref<1x30xf32, #tpu.memory_space<vmem>>, vector<1x30xf32>
    %16 = vector.broadcast %4 : vector<8x1xf32> to vector<8x30xf32>
    %17 = vector.broadcast %15 : vector<1x30xf32> to vector<8x30xf32>
    %18 = arith.mulf %16, %17 : vector<8x30xf32>
    %19 = arith.subf %14, %18 : vector<8x30xf32>
    %20 = vector.broadcast %12 : vector<8x1xf32> to vector<8x30xf32>
    %21 = arith.mulf %19, %20 : vector<8x30xf32>
    %c0_9 = arith.constant 0 : index
    %c0_10 = arith.constant 0 : index
    %22 = vector.load %arg3[%c0_9, %c0_10] : memref<256x30xf32, #tpu.memory_space<vmem>>, vector<256x30xf32>
    %23 = arith.mulf %21, %21 : vector<8x30xf32>
    %cst_11 = arith.constant dense<0.000000e+00> : vector<8xf32>
    %24 = vector.multi_reduction <add>, %23, %cst_11 [1] : vector<8x30xf32> to vector<8xf32>
    %25 = vector.shape_cast %24 : vector<8xf32> to vector<8x1xf32>
    %cst_12 = arith.constant dense<0.000000e+00> : vector<8x256xf32>
    %26 = tpu.matmul %21, %22, %cst_12 {dimension_numbers = #tpu.dot_dimension_numbers<[1], [1], [0], [0], [0, 0, 1, 0], [], []>} : vector<8x30xf32>, vector<256x30xf32>, vector<8x256xf32> -> vector<8x256xf32>
    %c0_13 = arith.constant 0 : index
    %c0_14 = arith.constant 0 : index
    %27 = vector.load %arg4[%c0_13, %c0_14] : memref<1x256xf32, #tpu.memory_space<vmem>>, vector<1x256xf32>
    %28 = vector.broadcast %27 : vector<1x256xf32> to vector<8x256xf32>
    %29 = vector.broadcast %25 : vector<8x1xf32> to vector<8x256xf32>
    %30 = arith.addf %28, %29 : vector<8x256xf32>
    %cst_15 = arith.constant 2.000000e+00 : f32
    %31 = vector.broadcast %cst_15 : f32 to vector<8x256xf32>
    %32 = arith.mulf %31, %26 : vector<8x256xf32>
    %33 = arith.subf %30, %32 : vector<8x256xf32>
    %cst_16 = arith.constant 0.000000e+00 : f32
    %34 = vector.broadcast %cst_16 : f32 to vector<8x256xf32>
    %35 = arith.maximumf %33, %34 : vector<8x256xf32>
    %36 = math.sqrt %35 : vector<8x256xf32>
    %cst_17 = arith.constant 0.000000e+00 : f32
    %37 = vector.broadcast %cst_17 : f32 to vector<8x256xf32>
    %38 = arith.subf %37, %36 : vector<8x256xf32>
    %39 = math.exp %38 : vector<8x256xf32>
    %40 = tpu.iota {dimensions = array<i32: 1>} : vector<8x256xi32>
    %cst_18 = arith.constant 0.000000e+00 : f32
    %41 = vector.broadcast %cst_18 : f32 to vector<8x256xf32>
    %c0_i32 = arith.constant 0 : i32
    %cst_19 = arith.constant dense<0x7F800000> : vector<8xf32>
    %42 = vector.multi_reduction <minimumf>, %35, %cst_19 [1] : vector<8x256xf32> to vector<8xf32>
    %43 = vector.shape_cast %42 : vector<8xf32> to vector<8x1xf32>
    %44 = vector.broadcast %43 : vector<8x1xf32> to vector<8x256xf32>
    %45 = arith.cmpf oeq, %35, %44 : vector<8x256xf32>
    %c256_i32 = arith.constant 256 : i32
    %46 = vector.broadcast %c256_i32 : i32 to vector<8x256xi32>
    %47 = arith.select %45, %40, %46 : vector<8x256xi1>, vector<8x256xi32>
    %cst_20 = arith.constant dense<2147483647> : vector<8xi32>
    %48 = vector.multi_reduction <minsi>, %47, %cst_20 [1] : vector<8x256xi32> to vector<8xi32>
    %49 = vector.shape_cast %48 : vector<8xi32> to vector<8x1xi32>
    %50 = vector.broadcast %49 : vector<8x1xi32> to vector<8x256xi32>
    %51 = arith.cmpi eq, %40, %50 : vector<8x256xi32>
    %cst_21 = arith.constant 0.000000e+00 : f32
    %52 = vector.broadcast %cst_21 : f32 to vector<8x256xf32>
    %53 = arith.select %51, %39, %52 : vector<8x256xi1>, vector<8x256xf32>
    %54 = arith.addf %41, %53 : vector<8x256xf32>
    %cst_22 = arith.constant 0x7F800000 : f32
    %55 = vector.broadcast %cst_22 : f32 to vector<8x256xf32>
    %56 = arith.select %51, %55, %35 : vector<8x256xi1>, vector<8x256xf32>
    %c1_i32 = arith.constant 1 : i32
    %cst_23 = arith.constant dense<0x7F800000> : vector<8xf32>
    %57 = vector.multi_reduction <minimumf>, %56, %cst_23 [1] : vector<8x256xf32> to vector<8xf32>
    %58 = vector.shape_cast %57 : vector<8xf32> to vector<8x1xf32>
    %59 = vector.broadcast %58 : vector<8x1xf32> to vector<8x256xf32>
    %60 = arith.cmpf oeq, %56, %59 : vector<8x256xf32>
    %c256_i32_24 = arith.constant 256 : i32
    %61 = vector.broadcast %c256_i32_24 : i32 to vector<8x256xi32>
    %62 = arith.select %60, %40, %61 : vector<8x256xi1>, vector<8x256xi32>
    %cst_25 = arith.constant dense<2147483647> : vector<8xi32>
    %63 = vector.multi_reduction <minsi>, %62, %cst_25 [1] : vector<8x256xi32> to vector<8xi32>
    %64 = vector.shape_cast %63 : vector<8xi32> to vector<8x1xi32>
    %65 = vector.broadcast %64 : vector<8x1xi32> to vector<8x256xi32>
    %66 = arith.cmpi eq, %40, %65 : vector<8x256xi32>
    %cst_26 = arith.constant 0.000000e+00 : f32
    %67 = vector.broadcast %cst_26 : f32 to vector<8x256xf32>
    %68 = arith.select %66, %39, %67 : vector<8x256xi1>, vector<8x256xf32>
    %69 = arith.addf %54, %68 : vector<8x256xf32>
    %cst_27 = arith.constant 0x7F800000 : f32
    %70 = vector.broadcast %cst_27 : f32 to vector<8x256xf32>
    %71 = arith.select %66, %70, %56 : vector<8x256xi1>, vector<8x256xf32>
    %c2_i32 = arith.constant 2 : i32
    %cst_28 = arith.constant dense<0x7F800000> : vector<8xf32>
    %72 = vector.multi_reduction <minimumf>, %71, %cst_28 [1] : vector<8x256xf32> to vector<8xf32>
    %73 = vector.shape_cast %72 : vector<8xf32> to vector<8x1xf32>
    %74 = vector.broadcast %73 : vector<8x1xf32> to vector<8x256xf32>
    %75 = arith.cmpf oeq, %71, %74 : vector<8x256xf32>
    %c256_i32_29 = arith.constant 256 : i32
    %76 = vector.broadcast %c256_i32_29 : i32 to vector<8x256xi32>
    %77 = arith.select %75, %40, %76 : vector<8x256xi1>, vector<8x256xi32>
    %cst_30 = arith.constant dense<2147483647> : vector<8xi32>
    %78 = vector.multi_reduction <minsi>, %77, %cst_30 [1] : vector<8x256xi32> to vector<8xi32>
    %79 = vector.shape_cast %78 : vector<8xi32> to vector<8x1xi32>
    %80 = vector.broadcast %79 : vector<8x1xi32> to vector<8x256xi32>
    %81 = arith.cmpi eq, %40, %80 : vector<8x256xi32>
    %cst_31 = arith.constant 0.000000e+00 : f32
    %82 = vector.broadcast %cst_31 : f32 to vector<8x256xf32>
    %83 = arith.select %81, %39, %82 : vector<8x256xi1>, vector<8x256xf32>
    %84 = arith.addf %69, %83 : vector<8x256xf32>
    %cst_32 = arith.constant 0x7F800000 : f32
    %85 = vector.broadcast %cst_32 : f32 to vector<8x256xf32>
    %86 = arith.select %81, %85, %71 : vector<8x256xi1>, vector<8x256xf32>
    %c3_i32 = arith.constant 3 : i32
    %cst_33 = arith.constant dense<0x7F800000> : vector<8xf32>
    %87 = vector.multi_reduction <minimumf>, %86, %cst_33 [1] : vector<8x256xf32> to vector<8xf32>
    %88 = vector.shape_cast %87 : vector<8xf32> to vector<8x1xf32>
    %89 = vector.broadcast %88 : vector<8x1xf32> to vector<8x256xf32>
    %90 = arith.cmpf oeq, %86, %89 : vector<8x256xf32>
    %c256_i32_34 = arith.constant 256 : i32
    %91 = vector.broadcast %c256_i32_34 : i32 to vector<8x256xi32>
    %92 = arith.select %90, %40, %91 : vector<8x256xi1>, vector<8x256xi32>
    %cst_35 = arith.constant dense<2147483647> : vector<8xi32>
    %93 = vector.multi_reduction <minsi>, %92, %cst_35 [1] : vector<8x256xi32> to vector<8xi32>
    %94 = vector.shape_cast %93 : vector<8xi32> to vector<8x1xi32>
    %95 = vector.broadcast %94 : vector<8x1xi32> to vector<8x256xi32>
    %96 = arith.cmpi eq, %40, %95 : vector<8x256xi32>
    %cst_36 = arith.constant 0.000000e+00 : f32
    %97 = vector.broadcast %cst_36 : f32 to vector<8x256xf32>
    %98 = arith.select %96, %39, %97 : vector<8x256xi1>, vector<8x256xf32>
    %99 = arith.addf %84, %98 : vector<8x256xf32>
    %cst_37 = arith.constant 0x7F800000 : f32
    %100 = vector.broadcast %cst_37 : f32 to vector<8x256xf32>
    %101 = arith.select %96, %100, %86 : vector<8x256xi1>, vector<8x256xf32>
    %c4_i32 = arith.constant 4 : i32
    %cst_38 = arith.constant dense<0x7F800000> : vector<8xf32>
    %102 = vector.multi_reduction <minimumf>, %101, %cst_38 [1] : vector<8x256xf32> to vector<8xf32>
    %103 = vector.shape_cast %102 : vector<8xf32> to vector<8x1xf32>
    %104 = vector.broadcast %103 : vector<8x1xf32> to vector<8x256xf32>
    %105 = arith.cmpf oeq, %101, %104 : vector<8x256xf32>
    %c256_i32_39 = arith.constant 256 : i32
    %106 = vector.broadcast %c256_i32_39 : i32 to vector<8x256xi32>
    %107 = arith.select %105, %40, %106 : vector<8x256xi1>, vector<8x256xi32>
    %cst_40 = arith.constant dense<2147483647> : vector<8xi32>
    %108 = vector.multi_reduction <minsi>, %107, %cst_40 [1] : vector<8x256xi32> to vector<8xi32>
    %109 = vector.shape_cast %108 : vector<8xi32> to vector<8x1xi32>
    %110 = vector.broadcast %109 : vector<8x1xi32> to vector<8x256xi32>
    %111 = arith.cmpi eq, %40, %110 : vector<8x256xi32>
    %cst_41 = arith.constant 0.000000e+00 : f32
    %112 = vector.broadcast %cst_41 : f32 to vector<8x256xf32>
    %113 = arith.select %111, %39, %112 : vector<8x256xi1>, vector<8x256xf32>
    %114 = arith.addf %99, %113 : vector<8x256xf32>
    %cst_42 = arith.constant 0x7F800000 : f32
    %115 = vector.broadcast %cst_42 : f32 to vector<8x256xf32>
    %116 = arith.select %111, %115, %101 : vector<8x256xi1>, vector<8x256xf32>
    %c5_i32 = arith.constant 5 : i32
    %cst_43 = arith.constant dense<0x7F800000> : vector<8xf32>
    %117 = vector.multi_reduction <minimumf>, %116, %cst_43 [1] : vector<8x256xf32> to vector<8xf32>
    %118 = vector.shape_cast %117 : vector<8xf32> to vector<8x1xf32>
    %119 = vector.broadcast %118 : vector<8x1xf32> to vector<8x256xf32>
    %120 = arith.cmpf oeq, %116, %119 : vector<8x256xf32>
    %c256_i32_44 = arith.constant 256 : i32
    %121 = vector.broadcast %c256_i32_44 : i32 to vector<8x256xi32>
    %122 = arith.select %120, %40, %121 : vector<8x256xi1>, vector<8x256xi32>
    %cst_45 = arith.constant dense<2147483647> : vector<8xi32>
    %123 = vector.multi_reduction <minsi>, %122, %cst_45 [1] : vector<8x256xi32> to vector<8xi32>
    %124 = vector.shape_cast %123 : vector<8xi32> to vector<8x1xi32>
    %125 = vector.broadcast %124 : vector<8x1xi32> to vector<8x256xi32>
    %126 = arith.cmpi eq, %40, %125 : vector<8x256xi32>
    %cst_46 = arith.constant 0.000000e+00 : f32
    %127 = vector.broadcast %cst_46 : f32 to vector<8x256xf32>
    %128 = arith.select %126, %39, %127 : vector<8x256xi1>, vector<8x256xf32>
    %129 = arith.addf %114, %128 : vector<8x256xf32>
    %cst_47 = arith.constant 0x7F800000 : f32
    %130 = vector.broadcast %cst_47 : f32 to vector<8x256xf32>
    %131 = arith.select %126, %130, %116 : vector<8x256xi1>, vector<8x256xf32>
    %c6_i32 = arith.constant 6 : i32
    %cst_48 = arith.constant dense<0x7F800000> : vector<8xf32>
    %132 = vector.multi_reduction <minimumf>, %131, %cst_48 [1] : vector<8x256xf32> to vector<8xf32>
    %133 = vector.shape_cast %132 : vector<8xf32> to vector<8x1xf32>
    %134 = vector.broadcast %133 : vector<8x1xf32> to vector<8x256xf32>
    %135 = arith.cmpf oeq, %131, %134 : vector<8x256xf32>
    %c256_i32_49 = arith.constant 256 : i32
    %136 = vector.broadcast %c256_i32_49 : i32 to vector<8x256xi32>
    %137 = arith.select %135, %40, %136 : vector<8x256xi1>, vector<8x256xi32>
    %cst_50 = arith.constant dense<2147483647> : vector<8xi32>
    %138 = vector.multi_reduction <minsi>, %137, %cst_50 [1] : vector<8x256xi32> to vector<8xi32>
    %139 = vector.shape_cast %138 : vector<8xi32> to vector<8x1xi32>
    %140 = vector.broadcast %139 : vector<8x1xi32> to vector<8x256xi32>
    %141 = arith.cmpi eq, %40, %140 : vector<8x256xi32>
    %cst_51 = arith.constant 0.000000e+00 : f32
    %142 = vector.broadcast %cst_51 : f32 to vector<8x256xf32>
    %143 = arith.select %141, %39, %142 : vector<8x256xi1>, vector<8x256xf32>
    %144 = arith.addf %129, %143 : vector<8x256xf32>
    %cst_52 = arith.constant 0x7F800000 : f32
    %145 = vector.broadcast %cst_52 : f32 to vector<8x256xf32>
    %146 = arith.select %141, %145, %131 : vector<8x256xi1>, vector<8x256xf32>
    %c7_i32 = arith.constant 7 : i32
    %cst_53 = arith.constant dense<0x7F800000> : vector<8xf32>
    %147 = vector.multi_reduction <minimumf>, %146, %cst_53 [1] : vector<8x256xf32> to vector<8xf32>
    %148 = vector.shape_cast %147 : vector<8xf32> to vector<8x1xf32>
    %149 = vector.broadcast %148 : vector<8x1xf32> to vector<8x256xf32>
    %150 = arith.cmpf oeq, %146, %149 : vector<8x256xf32>
    %c256_i32_54 = arith.constant 256 : i32
    %151 = vector.broadcast %c256_i32_54 : i32 to vector<8x256xi32>
    %152 = arith.select %150, %40, %151 : vector<8x256xi1>, vector<8x256xi32>
    %cst_55 = arith.constant dense<2147483647> : vector<8xi32>
    %153 = vector.multi_reduction <minsi>, %152, %cst_55 [1] : vector<8x256xi32> to vector<8xi32>
    %154 = vector.shape_cast %153 : vector<8xi32> to vector<8x1xi32>
    %155 = vector.broadcast %154 : vector<8x1xi32> to vector<8x256xi32>
    %156 = arith.cmpi eq, %40, %155 : vector<8x256xi32>
    %cst_56 = arith.constant 0.000000e+00 : f32
    %157 = vector.broadcast %cst_56 : f32 to vector<8x256xf32>
    %158 = arith.select %156, %39, %157 : vector<8x256xi1>, vector<8x256xf32>
    %159 = arith.addf %144, %158 : vector<8x256xf32>
    %cst_57 = arith.constant 0x7F800000 : f32
    %160 = vector.broadcast %cst_57 : f32 to vector<8x256xf32>
    %161 = arith.select %156, %160, %146 : vector<8x256xi1>, vector<8x256xf32>
    %c8_i32 = arith.constant 8 : i32
    %cst_58 = arith.constant dense<0x7F800000> : vector<8xf32>
    %162 = vector.multi_reduction <minimumf>, %161, %cst_58 [1] : vector<8x256xf32> to vector<8xf32>
    %163 = vector.shape_cast %162 : vector<8xf32> to vector<8x1xf32>
    %164 = vector.broadcast %163 : vector<8x1xf32> to vector<8x256xf32>
    %165 = arith.cmpf oeq, %161, %164 : vector<8x256xf32>
    %c256_i32_59 = arith.constant 256 : i32
    %166 = vector.broadcast %c256_i32_59 : i32 to vector<8x256xi32>
    %167 = arith.select %165, %40, %166 : vector<8x256xi1>, vector<8x256xi32>
    %cst_60 = arith.constant dense<2147483647> : vector<8xi32>
    %168 = vector.multi_reduction <minsi>, %167, %cst_60 [1] : vector<8x256xi32> to vector<8xi32>
    %169 = vector.shape_cast %168 : vector<8xi32> to vector<8x1xi32>
    %170 = vector.broadcast %169 : vector<8x1xi32> to vector<8x256xi32>
    %171 = arith.cmpi eq, %40, %170 : vector<8x256xi32>
    %cst_61 = arith.constant 0.000000e+00 : f32
    %172 = vector.broadcast %cst_61 : f32 to vector<8x256xf32>
    %173 = arith.select %171, %39, %172 : vector<8x256xi1>, vector<8x256xf32>
    %174 = arith.addf %159, %173 : vector<8x256xf32>
    %cst_62 = arith.constant 0x7F800000 : f32
    %175 = vector.broadcast %cst_62 : f32 to vector<8x256xf32>
    %176 = arith.select %171, %175, %161 : vector<8x256xi1>, vector<8x256xf32>
    %c9_i32 = arith.constant 9 : i32
    %cst_63 = arith.constant dense<0x7F800000> : vector<8xf32>
    %177 = vector.multi_reduction <minimumf>, %176, %cst_63 [1] : vector<8x256xf32> to vector<8xf32>
    %178 = vector.shape_cast %177 : vector<8xf32> to vector<8x1xf32>
    %179 = vector.broadcast %178 : vector<8x1xf32> to vector<8x256xf32>
    %180 = arith.cmpf oeq, %176, %179 : vector<8x256xf32>
    %c256_i32_64 = arith.constant 256 : i32
    %181 = vector.broadcast %c256_i32_64 : i32 to vector<8x256xi32>
    %182 = arith.select %180, %40, %181 : vector<8x256xi1>, vector<8x256xi32>
    %cst_65 = arith.constant dense<2147483647> : vector<8xi32>
    %183 = vector.multi_reduction <minsi>, %182, %cst_65 [1] : vector<8x256xi32> to vector<8xi32>
    %184 = vector.shape_cast %183 : vector<8xi32> to vector<8x1xi32>
    %185 = vector.broadcast %184 : vector<8x1xi32> to vector<8x256xi32>
    %186 = arith.cmpi eq, %40, %185 : vector<8x256xi32>
    %cst_66 = arith.constant 0.000000e+00 : f32
    %187 = vector.broadcast %cst_66 : f32 to vector<8x256xf32>
    %188 = arith.select %186, %39, %187 : vector<8x256xi1>, vector<8x256xf32>
    %189 = arith.addf %174, %188 : vector<8x256xf32>
    %cst_67 = arith.constant 0x7F800000 : f32
    %190 = vector.broadcast %cst_67 : f32 to vector<8x256xf32>
    %191 = arith.select %186, %190, %176 : vector<8x256xi1>, vector<8x256xf32>
    %c10_i32 = arith.constant 10 : i32
    %cst_68 = arith.constant dense<0x7F800000> : vector<8xf32>
    %192 = vector.multi_reduction <minimumf>, %191, %cst_68 [1] : vector<8x256xf32> to vector<8xf32>
    %193 = vector.shape_cast %192 : vector<8xf32> to vector<8x1xf32>
    %194 = vector.broadcast %193 : vector<8x1xf32> to vector<8x256xf32>
    %195 = arith.cmpf oeq, %191, %194 : vector<8x256xf32>
    %c256_i32_69 = arith.constant 256 : i32
    %196 = vector.broadcast %c256_i32_69 : i32 to vector<8x256xi32>
    %197 = arith.select %195, %40, %196 : vector<8x256xi1>, vector<8x256xi32>
    %cst_70 = arith.constant dense<2147483647> : vector<8xi32>
    %198 = vector.multi_reduction <minsi>, %197, %cst_70 [1] : vector<8x256xi32> to vector<8xi32>
    %199 = vector.shape_cast %198 : vector<8xi32> to vector<8x1xi32>
    %200 = vector.broadcast %199 : vector<8x1xi32> to vector<8x256xi32>
    %201 = arith.cmpi eq, %40, %200 : vector<8x256xi32>
    %cst_71 = arith.constant 0.000000e+00 : f32
    %202 = vector.broadcast %cst_71 : f32 to vector<8x256xf32>
    %203 = arith.select %201, %39, %202 : vector<8x256xi1>, vector<8x256xf32>
    %204 = arith.addf %189, %203 : vector<8x256xf32>
    %cst_72 = arith.constant 0x7F800000 : f32
    %205 = vector.broadcast %cst_72 : f32 to vector<8x256xf32>
    %206 = arith.select %201, %205, %191 : vector<8x256xi1>, vector<8x256xf32>
    %c11_i32 = arith.constant 11 : i32
    %cst_73 = arith.constant dense<0x7F800000> : vector<8xf32>
    %207 = vector.multi_reduction <minimumf>, %206, %cst_73 [1] : vector<8x256xf32> to vector<8xf32>
    %208 = vector.shape_cast %207 : vector<8xf32> to vector<8x1xf32>
    %209 = vector.broadcast %208 : vector<8x1xf32> to vector<8x256xf32>
    %210 = arith.cmpf oeq, %206, %209 : vector<8x256xf32>
    %c256_i32_74 = arith.constant 256 : i32
    %211 = vector.broadcast %c256_i32_74 : i32 to vector<8x256xi32>
    %212 = arith.select %210, %40, %211 : vector<8x256xi1>, vector<8x256xi32>
    %cst_75 = arith.constant dense<2147483647> : vector<8xi32>
    %213 = vector.multi_reduction <minsi>, %212, %cst_75 [1] : vector<8x256xi32> to vector<8xi32>
    %214 = vector.shape_cast %213 : vector<8xi32> to vector<8x1xi32>
    %215 = vector.broadcast %214 : vector<8x1xi32> to vector<8x256xi32>
    %216 = arith.cmpi eq, %40, %215 : vector<8x256xi32>
    %cst_76 = arith.constant 0.000000e+00 : f32
    %217 = vector.broadcast %cst_76 : f32 to vector<8x256xf32>
    %218 = arith.select %216, %39, %217 : vector<8x256xi1>, vector<8x256xf32>
    %219 = arith.addf %204, %218 : vector<8x256xf32>
    %cst_77 = arith.constant 0x7F800000 : f32
    %220 = vector.broadcast %cst_77 : f32 to vector<8x256xf32>
    %221 = arith.select %216, %220, %206 : vector<8x256xi1>, vector<8x256xf32>
    %c12_i32 = arith.constant 12 : i32
    %cst_78 = arith.constant dense<0x7F800000> : vector<8xf32>
    %222 = vector.multi_reduction <minimumf>, %221, %cst_78 [1] : vector<8x256xf32> to vector<8xf32>
    %223 = vector.shape_cast %222 : vector<8xf32> to vector<8x1xf32>
    %224 = vector.broadcast %223 : vector<8x1xf32> to vector<8x256xf32>
    %225 = arith.cmpf oeq, %221, %224 : vector<8x256xf32>
    %c256_i32_79 = arith.constant 256 : i32
    %226 = vector.broadcast %c256_i32_79 : i32 to vector<8x256xi32>
    %227 = arith.select %225, %40, %226 : vector<8x256xi1>, vector<8x256xi32>
    %cst_80 = arith.constant dense<2147483647> : vector<8xi32>
    %228 = vector.multi_reduction <minsi>, %227, %cst_80 [1] : vector<8x256xi32> to vector<8xi32>
    %229 = vector.shape_cast %228 : vector<8xi32> to vector<8x1xi32>
    %230 = vector.broadcast %229 : vector<8x1xi32> to vector<8x256xi32>
    %231 = arith.cmpi eq, %40, %230 : vector<8x256xi32>
    %cst_81 = arith.constant 0.000000e+00 : f32
    %232 = vector.broadcast %cst_81 : f32 to vector<8x256xf32>
    %233 = arith.select %231, %39, %232 : vector<8x256xi1>, vector<8x256xf32>
    %234 = arith.addf %219, %233 : vector<8x256xf32>
    %cst_82 = arith.constant 0x7F800000 : f32
    %235 = vector.broadcast %cst_82 : f32 to vector<8x256xf32>
    %236 = arith.select %231, %235, %221 : vector<8x256xi1>, vector<8x256xf32>
    %c13_i32 = arith.constant 13 : i32
    %cst_83 = arith.constant dense<0x7F800000> : vector<8xf32>
    %237 = vector.multi_reduction <minimumf>, %236, %cst_83 [1] : vector<8x256xf32> to vector<8xf32>
    %238 = vector.shape_cast %237 : vector<8xf32> to vector<8x1xf32>
    %239 = vector.broadcast %238 : vector<8x1xf32> to vector<8x256xf32>
    %240 = arith.cmpf oeq, %236, %239 : vector<8x256xf32>
    %c256_i32_84 = arith.constant 256 : i32
    %241 = vector.broadcast %c256_i32_84 : i32 to vector<8x256xi32>
    %242 = arith.select %240, %40, %241 : vector<8x256xi1>, vector<8x256xi32>
    %cst_85 = arith.constant dense<2147483647> : vector<8xi32>
    %243 = vector.multi_reduction <minsi>, %242, %cst_85 [1] : vector<8x256xi32> to vector<8xi32>
    %244 = vector.shape_cast %243 : vector<8xi32> to vector<8x1xi32>
    %245 = vector.broadcast %244 : vector<8x1xi32> to vector<8x256xi32>
    %246 = arith.cmpi eq, %40, %245 : vector<8x256xi32>
    %cst_86 = arith.constant 0.000000e+00 : f32
    %247 = vector.broadcast %cst_86 : f32 to vector<8x256xf32>
    %248 = arith.select %246, %39, %247 : vector<8x256xi1>, vector<8x256xf32>
    %249 = arith.addf %234, %248 : vector<8x256xf32>
    %cst_87 = arith.constant 0x7F800000 : f32
    %250 = vector.broadcast %cst_87 : f32 to vector<8x256xf32>
    %251 = arith.select %246, %250, %236 : vector<8x256xi1>, vector<8x256xf32>
    %c14_i32 = arith.constant 14 : i32
    %cst_88 = arith.constant dense<0x7F800000> : vector<8xf32>
    %252 = vector.multi_reduction <minimumf>, %251, %cst_88 [1] : vector<8x256xf32> to vector<8xf32>
    %253 = vector.shape_cast %252 : vector<8xf32> to vector<8x1xf32>
    %254 = vector.broadcast %253 : vector<8x1xf32> to vector<8x256xf32>
    %255 = arith.cmpf oeq, %251, %254 : vector<8x256xf32>
    %c256_i32_89 = arith.constant 256 : i32
    %256 = vector.broadcast %c256_i32_89 : i32 to vector<8x256xi32>
    %257 = arith.select %255, %40, %256 : vector<8x256xi1>, vector<8x256xi32>
    %cst_90 = arith.constant dense<2147483647> : vector<8xi32>
    %258 = vector.multi_reduction <minsi>, %257, %cst_90 [1] : vector<8x256xi32> to vector<8xi32>
    %259 = vector.shape_cast %258 : vector<8xi32> to vector<8x1xi32>
    %260 = vector.broadcast %259 : vector<8x1xi32> to vector<8x256xi32>
    %261 = arith.cmpi eq, %40, %260 : vector<8x256xi32>
    %cst_91 = arith.constant 0.000000e+00 : f32
    %262 = vector.broadcast %cst_91 : f32 to vector<8x256xf32>
    %263 = arith.select %261, %39, %262 : vector<8x256xi1>, vector<8x256xf32>
    %264 = arith.addf %249, %263 : vector<8x256xf32>
    %cst_92 = arith.constant 0x7F800000 : f32
    %265 = vector.broadcast %cst_92 : f32 to vector<8x256xf32>
    %266 = arith.select %261, %265, %251 : vector<8x256xi1>, vector<8x256xf32>
    %c0_93 = arith.constant 0 : index
    %c0_94 = arith.constant 0 : index
    %267 = vector.load %arg5[%c0_93, %c0_94] : memref<256x10xf32, #tpu.memory_space<vmem>>, vector<256x10xf32>
    %cst_95 = arith.constant dense<0.000000e+00> : vector<8x10xf32>
    %268 = tpu.matmul %264, %267, %cst_95 {dimension_numbers = #tpu.dot_dimension_numbers<[1], [0], [0], [1], [0, 0, 1, 1], [], []>} : vector<8x256xf32>, vector<256x10xf32>, vector<8x10xf32> -> vector<8x10xf32>
    %269 = math.log %268 : vector<8x10xf32>
    %c0_96 = arith.constant 0 : index
    %c0_97 = arith.constant 0 : index
    %270 = vector.load %arg6[%c0_96, %c0_97] : memref<8x10xf32, #tpu.memory_space<vmem>>, vector<8x10xf32>
    tpu.vector_store %arg6[%c0_96, %c0_97], %269 {strides = array<i32>} : memref<8x10xf32, #tpu.memory_space<vmem>>, vector<8x10xf32>,
    return
  }
}

</mosaic_0001>

<llo_original>
// kernel: tpu_custom_call.1
$region0: #{tpu_custom_call.1}
  #allocation0 [shape = 'u32[]', space=smem, size = 0x4, offset = 0x4, fixed_abs, tag = 'smem constant byte address 0x4 - core index']
  #allocation1 [shape = 'u32[72,128]{1,0:T(1,128)}', space=vmem, size = 0x9000, scoped, tag = 'internal scratch']
  %s0 = inlined_call_operand.vmem [shape: f32[8,768], index: 0, kind: input, shape index: {}]
  %s1 = inlined_call_operand.vmem [shape: f32[768,30], index: 1, kind: input, shape index: {}]
  %s2 = inlined_call_operand.vmem [shape: f32[1,30], index: 2, kind: input, shape index: {}]
  %s3 = inlined_call_operand.vmem [shape: f32[256,30], index: 3, kind: input, shape index: {}]
  %s4 = inlined_call_operand.vmem [shape: f32[1,256], index: 4, kind: input, shape index: {}]
  %s5 = inlined_call_operand.vmem [shape: f32[256,10], index: 5, kind: input, shape index: {}]
  %s6 = inlined_call_operand.hbm [shape: f32[8,10], index: 6, kind: output, shape index: {}]
  %s7 = sld [smem:[#allocation0]]
  $region34: #{tpu_custom_call.1} parent=0
    _
  %s9 = ssub.s32 1, %s7
  %s10 = scalar_select 0, %s9, %s7
  $region1: #{tpu_custom_call.1} parent=0
    #allocation2 [shape = 'u8[4096]{0}', space=vmem, size = 0x1000, scoped, tag = 'output window, operand 0, single buffered']
    #allocation3 [shape = 's32[1]{0}', space=sflag, size = 0x4, scoped, tag = 'scoped memory for tpu_custom_call.1']
    %11 = vsyncpa [#allocation3], 0
    // Predicated region
    $region2: #{tpu_custom_call.1} parent=1 // pred_check
      _
    $region3: #{tpu_custom_call.1} parent=1 // pred_check_branch
      %13 = sbr.rel (0) target = $region5
    $region4: #{tpu_custom_call.1} parent=1 // pred_region
      _
    $region5: #{tpu_custom_call.1} parent=1 // pred_fallthru
      _
    // Predicated region
    $region6: #{tpu_custom_call.1} parent=1 // pred_check
      _
    $region7: #{tpu_custom_call.1} parent=1 // pred_check_branch
      %15 = sbr.rel (0) target = $region9
    $region8: #{tpu_custom_call.1} parent=1 // pred_region
      _
    $region9: #{tpu_custom_call.1} parent=1 // pred_fallthru
      _
    // Predicated region
    $region10: #{tpu_custom_call.1} parent=1 // pred_check
      _
    $region11: #{tpu_custom_call.1} parent=1 // pred_check_branch
      %17 = sbr.rel (0) target = $region13
    $region12: #{tpu_custom_call.1} parent=1 // pred_region
      _
    $region13: #{tpu_custom_call.1} parent=1 // pred_fallthru
      _
    // Predicated region
    $region14: #{tpu_custom_call.1} parent=1 // pred_check
      _
    $region15: #{tpu_custom_call.1} parent=1 // pred_check_branch
      %19 = sbr.rel (0) target = $region17
    $region16: #{tpu_custom_call.1} parent=1 // pred_region
      _
    $region17: #{tpu_custom_call.1} parent=1 // pred_fallthru
      _
    // Predicated region
    $region18: #{tpu_custom_call.1} parent=1 // pred_check
      _
    $region19: #{tpu_custom_call.1} parent=1 // pred_check_branch
      %21 = sbr.rel (0) target = $region21
    $region20: #{tpu_custom_call.1} parent=1 // pred_region
      _
    $region21: #{tpu_custom_call.1} parent=1 // pred_fallthru
      _
    // Predicated region
    $region22: #{tpu_custom_call.1} parent=1 // pred_check
      _
    $region23: #{tpu_custom_call.1} parent=1 // pred_check_branch
      %23 = sbr.rel (0) target = $region25
    $region24: #{tpu_custom_call.1} parent=1 // pred_region
      _
    $region25: #{tpu_custom_call.1} parent=1 // pred_fallthru
      _
    %v24 = vld [vmem:[%s0] sm:$0xff]
    %v25 = vld [vmem:[%s0 + $0x8] sm:$0xff]
    %v26 = vld [vmem:[%s0 + $0x10] sm:$0xff]
    %v27 = vld [vmem:[%s0 + $0x18] sm:$0xff]
    %v28 = vld [vmem:[%s0 + $0x20] sm:$0xff]
    %v29 = vld [vmem:[%s0 + $0x28] sm:$0xff]
    %v30 = vadd.f32 %v24, %v25
    %v31 = vadd.f32 %v30, %v26
    %v32 = vadd.f32 %v31, %v27
    %v33 = vadd.f32 %v32, %v28
    %v34 = vadd.f32 %v33, %v29
    %35 = vadd.xlane.f32.xlu0 %v34
    %v36 = vpop.xlane.xlu0 %35
    %v37 = vmul.f32 %v36, 0.0013020834
    %v38 = vmul.f32 %v24, %v24
    %v39 = vmul.f32 %v25, %v25
    %v40 = vmul.f32 %v26, %v26
    %v41 = vmul.f32 %v27, %v27
    %v42 = vmul.f32 %v28, %v28
    %v43 = vmul.f32 %v29, %v29
    %v44 = vadd.f32 %v38, %v39
    %v45 = vadd.f32 %v44, %v40
    %v46 = vadd.f32 %v45, %v41
    %v47 = vadd.f32 %v46, %v42
    %v48 = vadd.f32 %v47, %v43
    %49 = vadd.xlane.f32.xlu0 %v48
    %v50 = vpop.xlane.xlu0 %49
    %v51 = vmul.f32 %v37, 768.0
    %v52 = vmul.f32 %v51, %v37
    %v53 = vsub.f32 %v50, %v52
    %v54 = vrsqrt.pop %v53
    %v55 = vmul.f32 %v54, %v53
    %v56 = vmul.f32 %v55, %v54
    %v57 = vmul.f32 0.5, %v56
    %v58 = vsub.f32 1.5, %v57
    %v59 = vmul.f32 %v54, %v58
    %vm60 = vweird.f32 %v53
    %vm61 = vweird.f32 %v54
    %vm62 = vmor %vm60, %vm61
    %v63 = vsel %vm62, %v54, %v59
    %v64 = vld [vmem:[%s1] sm:$0xff]
    %v65 = vld [vmem:[%s1 + $0x8] sm:$0xff]
    %v66 = vld [vmem:[%s1 + $0x10] sm:$0xff]
    %v67 = vld [vmem:[%s1 + $0x18] sm:$0xff]
    %v68 = vld [vmem:[%s1 + $0x20] sm:$0xff]
    %v69 = vld [vmem:[%s1 + $0x28] sm:$0xff]
    %v70 = vld [vmem:[%s1 + $0x30] sm:$0xff]
    %v71 = vld [vmem:[%s1 + $0x38] sm:$0xff]
    %v72 = vld [vmem:[%s1 + $0x40] sm:$0xff]
    %v73 = vld [vmem:[%s1 + $0x48] sm:$0xff]
    %v74 = vld [vmem:[%s1 + $0x50] sm:$0xff]
    %v75 = vld [vmem:[%s1 + $0x58] sm:$0xff]
    %v76 = vld [vmem:[%s1 + $0x60] sm:$0xff]
    %v77 = vld [vmem:[%s1 + $0x68] sm:$0xff]
    %v78 = vld [vmem:[%s1 + $0x70] sm:$0xff]
    %v79 = vld [vmem:[%s1 + $0x78] sm:$0xff]
    %v80 = vld [vmem:[%s1 + $0x80] sm:$0xff]
    %v81 = vld [vmem:[%s1 + $0x88] sm:$0xff]
    %v82 = vld [vmem:[%s1 + $0x90] sm:$0xff]
    %v83 = vld [vmem:[%s1 + $0x98] sm:$0xff]
    %v84 = vld [vmem:[%s1 + $0xa0] sm:$0xff]
    %v85 = vld [vmem:[%s1 + $0xa8] sm:$0xff]
    %v86 = vld [vmem:[%s1 + $0xb0] sm:$0xff]
    %v87 = vld [vmem:[%s1 + $0xb8] sm:$0xff]
    %v88 = vld [vmem:[%s1 + $0xc0] sm:$0xff]
    %v89 = vld [vmem:[%s1 + $0xc8] sm:$0xff]
    %v90 = vld [vmem:[%s1 + $0xd0] sm:$0xff]
    %v91 = vld [vmem:[%s1 + $0xd8] sm:$0xff]
    %v92 = vld [vmem:[%s1 + $0xe0] sm:$0xff]
    %v93 = vld [vmem:[%s1 + $0xe8] sm:$0xff]
    %v94 = vld [vmem:[%s1 + $0xf0] sm:$0xff]
    %v95 = vld [vmem:[%s1 + $0xf8] sm:$0xff]
    %v96 = vld [vmem:[%s1 + $0x100] sm:$0xff]
    %v97 = vld [vmem:[%s1 + $0x108] sm:$0xff]
    %v98 = vld [vmem:[%s1 + $0x110] sm:$0xff]
    %v99 = vld [vmem:[%s1 + $0x118] sm:$0xff]
    %v100 = vld [vmem:[%s1 + $0x120] sm:$0xff]
    %v101 = vld [vmem:[%s1 + $0x128] sm:$0xff]
    %v102 = vld [vmem:[%s1 + $0x130] sm:$0xff]
    %v103 = vld [vmem:[%s1 + $0x138] sm:$0xff]
    %v104 = vld [vmem:[%s1 + $0x140] sm:$0xff]
    %v105 = vld [vmem:[%s1 + $0x148] sm:$0xff]
    %v106 = vld [vmem:[%s1 + $0x150] sm:$0xff]
    %v107 = vld [vmem:[%s1 + $0x158] sm:$0xff]
    %v108 = vld [vmem:[%s1 + $0x160] sm:$0xff]
    %v109 = vld [vmem:[%s1 + $0x168] sm:$0xff]
    %v110 = vld [vmem:[%s1 + $0x170] sm:$0xff]
    %v111 = vld [vmem:[%s1 + $0x178] sm:$0xff]
    %v112 = vld [vmem:[%s1 + $0x180] sm:$0xff]
    %v113 = vld [vmem:[%s1 + $0x188] sm:$0xff]
    %v114 = vld [vmem:[%s1 + $0x190] sm:$0xff]
    %v115 = vld [vmem:[%s1 + $0x198] sm:$0xff]
    %v116 = vld [vmem:[%s1 + $0x1a0] sm:$0xff]
    %v117 = vld [vmem:[%s1 + $0x1a8] sm:$0xff]
    %v118 = vld [vmem:[%s1 + $0x1b0] sm:$0xff]
    %v119 = vld [vmem:[%s1 + $0x1b8] sm:$0xff]
    %v120 = vld [vmem:[%s1 + $0x1c0] sm:$0xff]
    %v121 = vld [vmem:[%s1 + $0x1c8] sm:$0xff]
    %v122 = vld [vmem:[%s1 + $0x1d0] sm:$0xff]
    %v123 = vld [vmem:[%s1 + $0x1d8] sm:$0xff]
    %v124 = vld [vmem:[%s1 + $0x1e0] sm:$0xff]
    %v125 = vld [vmem:[%s1 + $0x1e8] sm:$0xff]
    %v126 = vld [vmem:[%s1 + $0x1f0] sm:$0xff]
    %v127 = vld [vmem:[%s1 + $0x1f8] sm:$0xff]
    %v128 = vld [vmem:[%s1 + $0x200] sm:$0xff]
    %v129 = vld [vmem:[%s1 + $0x208] sm:$0xff]
    %v130 = vld [vmem:[%s1 + $0x210] sm:$0xff]
    %v131 = vld [vmem:[%s1 + $0x218] sm:$0xff]
    %v132 = vld [vmem:[%s1 + $0x220] sm:$0xff]
    %v133 = vld [vmem:[%s1 + $0x228] sm:$0xff]
    %v134 = vld [vmem:[%s1 + $0x230] sm:$0xff]
    %v135 = vld [vmem:[%s1 + $0x238] sm:$0xff]
    %v136 = vld [vmem:[%s1 + $0x240] sm:$0xff]
    %v137 = vld [vmem:[%s1 + $0x248] sm:$0xff]
    %v138 = vld [vmem:[%s1 + $0x250] sm:$0xff]
    %v139 = vld [vmem:[%s1 + $0x258] sm:$0xff]
    %v140 = vld [vmem:[%s1 + $0x260] sm:$0xff]
    %v141 = vld [vmem:[%s1 + $0x268] sm:$0xff]
    %v142 = vld [vmem:[%s1 + $0x270] sm:$0xff]
    %v143 = vld [vmem:[%s1 + $0x278] sm:$0xff]
    %v144 = vld [vmem:[%s1 + $0x280] sm:$0xff]
    %v145 = vld [vmem:[%s1 + $0x288] sm:$0xff]
    %v146 = vld [vmem:[%s1 + $0x290] sm:$0xff]
    %v147 = vld [vmem:[%s1 + $0x298] sm:$0xff]
    %v148 = vld [vmem:[%s1 + $0x2a0] sm:$0xff]
    %v149 = vld [vmem:[%s1 + $0x2a8] sm:$0xff]
    %v150 = vld [vmem:[%s1 + $0x2b0] sm:$0xff]
    %v151 = vld [vmem:[%s1 + $0x2b8] sm:$0xff]
    %v152 = vld [vmem:[%s1 + $0x2c0] sm:$0xff]
    %v153 = vld [vmem:[%s1 + $0x2c8] sm:$0xff]
    %v154 = vld [vmem:[%s1 + $0x2d0] sm:$0xff]
    %v155 = vld [vmem:[%s1 + $0x2d8] sm:$0xff]
    %v156 = vld [vmem:[%s1 + $0x2e0] sm:$0xff]
    %v157 = vld [vmem:[%s1 + $0x2e8] sm:$0xff]
    %v158 = vld [vmem:[%s1 + $0x2f0] sm:$0xff]
    %v159 = vld [vmem:[%s1 + $0x2f8] sm:$0xff]
    %160 = vmatpush.msra.mxu0 %v79
    %161 = vmatpush.msra.mxu0 %v78
    %162 = vmatpush.msra.mxu0 %v77
    %163 = vmatpush.msra.mxu0 %v76
    %164 = vmatpush.msra.mxu0 %v75
    %165 = vmatpush.msra.mxu0 %v74
    %166 = vmatpush.msra.mxu0 %v73
    %167 = vmatpush.msra.mxu0 %v72
    %168 = vmatpush.msra.mxu0 %v71
    %169 = vmatpush.msra.mxu0 %v70
    %170 = vmatpush.msra.mxu0 %v69
    %171 = vmatpush.msra.mxu0 %v68
    %172 = vmatpush.msra.mxu0 %v67
    %173 = vmatpush.msra.mxu0 %v66
    %174 = vmatpush.msra.mxu0 %v65
    %175 = vmatpush.msra.mxu0 %v64
    %176 = vmatmul.f32.gmra.mxu0 %v24
    %v177 = vpop.f32.mrf.mxu0
    %v178 = vadd.f32 0.0, %v177
    %179 = vdwg.mxu0
    %180 = vmatpush.msra.mxu0 %v95
    %181 = vmatpush.msra.mxu0 %v94
    %182 = vmatpush.msra.mxu0 %v93
    %183 = vmatpush.msra.mxu0 %v92
    %184 = vmatpush.msra.mxu0 %v91
    %185 = vmatpush.msra.mxu0 %v90
    %186 = vmatpush.msra.mxu0 %v89
    %187 = vmatpush.msra.mxu0 %v88
    %188 = vmatpush.msra.mxu0 %v87
    %189 = vmatpush.msra.mxu0 %v86
    %190 = vmatpush.msra.mxu0 %v85
    %191 = vmatpush.msra.mxu0 %v84
    %192 = vmatpush.msra.mxu0 %v83
    %193 = vmatpush.msra.mxu0 %v82
    %194 = vmatpush.msra.mxu0 %v81
    %195 = vmatpush.msra.mxu0 %v80
    %196 = vmatmul.f32.gmra.mxu0 %v25
    %v197 = vpop.f32.mrf.mxu0
    %v198 = vadd.f32 %v178, %v197
    %199 = vdwg.mxu0
    %200 = vmatpush.msra.mxu0 %v111
    %201 = vmatpush.msra.mxu0 %v110
    %202 = vmatpush.msra.mxu0 %v109
    %203 = vmatpush.msra.mxu0 %v108
    %204 = vmatpush.msra.mxu0 %v107
    %205 = vmatpush.msra.mxu0 %v106
    %206 = vmatpush.msra.mxu0 %v105
    %207 = vmatpush.msra.mxu0 %v104
    %208 = vmatpush.msra.mxu0 %v103
    %209 = vmatpush.msra.mxu0 %v102
    %210 = vmatpush.msra.mxu0 %v101
    %211 = vmatpush.msra.mxu0 %v100
    %212 = vmatpush.msra.mxu0 %v99
    %213 = vmatpush.msra.mxu0 %v98
    %214 = vmatpush.msra.mxu0 %v97
    %215 = vmatpush.msra.mxu0 %v96
    %216 = vmatmul.f32.gmra.mxu0 %v26
    %v217 = vpop.f32.mrf.mxu0
    %v218 = vadd.f32 %v198, %v217
    %219 = vdwg.mxu0
    %220 = vmatpush.msra.mxu0 %v127
    %221 = vmatpush.msra.mxu0 %v126
    %222 = vmatpush.msra.mxu0 %v125
    %223 = vmatpush.msra.mxu0 %v124
    %224 = vmatpush.msra.mxu0 %v123
    %225 = vmatpush.msra.mxu0 %v122
    %226 = vmatpush.msra.mxu0 %v121
    %227 = vmatpush.msra.mxu0 %v120
    %228 = vmatpush.msra.mxu0 %v119
    %229 = vmatpush.msra.mxu0 %v118
    %230 = vmatpush.msra.mxu0 %v117
    %231 = vmatpush.msra.mxu0 %v116
    %232 = vmatpush.msra.mxu0 %v115
    %233 = vmatpush.msra.mxu0 %v114
    %234 = vmatpush.msra.mxu0 %v113
    %235 = vmatpush.msra.mxu0 %v112
    %236 = vmatmul.f32.gmra.mxu0 %v27
    %v237 = vpop.f32.mrf.mxu0
    %v238 = vadd.f32 %v218, %v237
    %239 = vdwg.mxu0
    %240 = vmatpush.msra.mxu0 %v143
    %241 = vmatpush.msra.mxu0 %v142
    %242 = vmatpush.msra.mxu0 %v141
    %243 = vmatpush.msra.mxu0 %v140
    %244 = vmatpush.msra.mxu0 %v139
    %245 = vmatpush.msra.mxu0 %v138
    %246 = vmatpush.msra.mxu0 %v137
    %247 = vmatpush.msra.mxu0 %v136
    %248 = vmatpush.msra.mxu0 %v135
    %249 = vmatpush.msra.mxu0 %v134
    %250 = vmatpush.msra.mxu0 %v133
    %251 = vmatpush.msra.mxu0 %v132
    %252 = vmatpush.msra.mxu0 %v131
    %253 = vmatpush.msra.mxu0 %v130
    %254 = vmatpush.msra.mxu0 %v129
    %255 = vmatpush.msra.mxu0 %v128
    %256 = vmatmul.f32.gmra.mxu0 %v28
    %v257 = vpop.f32.mrf.mxu0
    %v258 = vadd.f32 %v238, %v257
    %259 = vdwg.mxu0
    %260 = vmatpush.msra.mxu0 %v159
    %261 = vmatpush.msra.mxu0 %v158
    %262 = vmatpush.msra.mxu0 %v157
    %263 = vmatpush.msra.mxu0 %v156
    %264 = vmatpush.msra.mxu0 %v155
    %265 = vmatpush.msra.mxu0 %v154
    %266 = vmatpush.msra.mxu0 %v153
    %267 = vmatpush.msra.mxu0 %v152
    %268 = vmatpush.msra.mxu0 %v151
    %269 = vmatpush.msra.mxu0 %v150
    %270 = vmatpush.msra.mxu0 %v149
    %271 = vmatpush.msra.mxu0 %v148
    %272 = vmatpush.msra.mxu0 %v147
    %273 = vmatpush.msra.mxu0 %v146
    %274 = vmatpush.msra.mxu0 %v145
    %275 = vmatpush.msra.mxu0 %v144
    %276 = vmatmul.f32.gmra.mxu0 %v29
    %v277 = vpop.f32.mrf.mxu0
    %v278 = vadd.f32 %v258, %v277
    %279 = vdwg.mxu0
    %v280 = vld [vmem:[%s2] sm:$0x1]
    %v282 = vperm.slane %v280, 0
    %v284 = vmul.f32 %v37, %v282
    %v285 = vsub.f32 %v278, %v284
    %v286 = vmul.f32 %v285, %v63
    %v287 = vld [vmem:[%s3] sm:$0xff]
    %v288 = vld [vmem:[%s3 + $0x8] sm:$0xff]
    %v289 = vld [vmem:[%s3 + $0x10] sm:$0xff]
    %v290 = vld [vmem:[%s3 + $0x18] sm:$0xff]
    %v291 = vld [vmem:[%s3 + $0x20] sm:$0xff]
    %v292 = vld [vmem:[%s3 + $0x28] sm:$0xff]
    %v293 = vld [vmem:[%s3 + $0x30] sm:$0xff]
    %v294 = vld [vmem:[%s3 + $0x38] sm:$0xff]
    %v295 = vld [vmem:[%s3 + $0x40] sm:$0xff]
    %v296 = vld [vmem:[%s3 + $0x48] sm:$0xff]
    %v297 = vld [vmem:[%s3 + $0x50] sm:$0xff]
    %v298 = vld [vmem:[%s3 + $0x58] sm:$0xff]
    %v299 = vld [vmem:[%s3 + $0x60] sm:$0xff]
    %v300 = vld [vmem:[%s3 + $0x68] sm:$0xff]
    %v301 = vld [vmem:[%s3 + $0x70] sm:$0xff]
    %v302 = vld [vmem:[%s3 + $0x78] sm:$0xff]
    %v303 = vld [vmem:[%s3 + $0x80] sm:$0xff]
    %v304 = vld [vmem:[%s3 + $0x88] sm:$0xff]
    %v305 = vld [vmem:[%s3 + $0x90] sm:$0xff]
    %v306 = vld [vmem:[%s3 + $0x98] sm:$0xff]
    %v307 = vld [vmem:[%s3 + $0xa0] sm:$0xff]
    %v308 = vld [vmem:[%s3 + $0xa8] sm:$0xff]
    %v309 = vld [vmem:[%s3 + $0xb0] sm:$0xff]
    %v310 = vld [vmem:[%s3 + $0xb8] sm:$0xff]
    %v311 = vld [vmem:[%s3 + $0xc0] sm:$0xff]
    %v312 = vld [vmem:[%s3 + $0xc8] sm:$0xff]
    %v313 = vld [vmem:[%s3 + $0xd0] sm:$0xff]
    %v314 = vld [vmem:[%s3 + $0xd8] sm:$0xff]
    %v315 = vld [vmem:[%s3 + $0xe0] sm:$0xff]
    %v316 = vld [vmem:[%s3 + $0xe8] sm:$0xff]
    %v317 = vld [vmem:[%s3 + $0xf0] sm:$0xff]
    %v318 = vld [vmem:[%s3 + $0xf8] sm:$0xff]
    %v319 = vmul.f32 %v286, %v286
    %vm320 = vcmask 244736
    %v321 = vsel %vm320, %v319, 0.0
    %322 = vadd.xlane.f32.xlu0 %v321
    %v323 = vpop.xlane.xlu0 %322
    %v325 = vsel %vm320, %v286, 0
    %v328 = vsel %vm320, %v287, 0
    %v331 = vsel %vm320, %v288, 0
    %v334 = vsel %vm320, %v289, 0
    %v337 = vsel %vm320, %v290, 0
    %v340 = vsel %vm320, %v291, 0
    %v343 = vsel %vm320, %v292, 0
    %v346 = vsel %vm320, %v293, 0
    %v349 = vsel %vm320, %v294, 0
    %v352 = vsel %vm320, %v295, 0
    %v355 = vsel %vm320, %v296, 0
    %v358 = vsel %vm320, %v297, 0
    %v361 = vsel %vm320, %v298, 0
    %v364 = vsel %vm320, %v299, 0
    %v367 = vsel %vm320, %v300, 0
    %v370 = vsel %vm320, %v301, 0
    %v373 = vsel %vm320, %v302, 0
    %v376 = vsel %vm320, %v303, 0
    %v379 = vsel %vm320, %v304, 0
    %v382 = vsel %vm320, %v305, 0
    %v385 = vsel %vm320, %v306, 0
    %v388 = vsel %vm320, %v307, 0
    %v391 = vsel %vm320, %v308, 0
    %v394 = vsel %vm320, %v309, 0
    %v397 = vsel %vm320, %v310, 0
    %v400 = vsel %vm320, %v311, 0
    %v403 = vsel %vm320, %v312, 0
    %v406 = vsel %vm320, %v313, 0
    %v409 = vsel %vm320, %v314, 0
    %v412 = vsel %vm320, %v315, 0
    %v415 = vsel %vm320, %v316, 0
    %v418 = vsel %vm320, %v317, 0
    %v421 = vsel %vm320, %v318, 0
    %423 = vmatpush.xpose.msra.mxu0 %v373
    %424 = vmatpush.xpose.msra.mxu0 %v370
    %425 = vmatpush.xpose.msra.mxu0 %v367
    %426 = vmatpush.xpose.msra.mxu0 %v364
    %427 = vmatpush.xpose.msra.mxu0 %v361
    %428 = vmatpush.xpose.msra.mxu0 %v358
    %429 = vmatpush.xpose.msra.mxu0 %v355
    %430 = vmatpush.xpose.msra.mxu0 %v352
    %431 = vmatpush.xpose.msra.mxu0 %v349
    %432 = vmatpush.xpose.msra.mxu0 %v346
    %433 = vmatpush.xpose.msra.mxu0 %v343
    %434 = vmatpush.xpose.msra.mxu0 %v340
    %435 = vmatpush.xpose.msra.mxu0 %v337
    %436 = vmatpush.xpose.msra.mxu0 %v334
    %437 = vmatpush.xpose.msra.mxu0 %v331
    %438 = vmatpush.xpose.msra.mxu0 %v328
    %439 = vmatmul.f32.gmra.mxu0 %v325
    %v440 = vpop.f32.mrf.mxu0
    %v441 = vadd.f32 0.0, %v440
    %442 = vdwg.mxu0
    %443 = vmatpush.xpose.msra.mxu0 %v421
    %444 = vmatpush.xpose.msra.mxu0 %v418
    %445 = vmatpush.xpose.msra.mxu0 %v415
    %446 = vmatpush.xpose.msra.mxu0 %v412
    %447 = vmatpush.xpose.msra.mxu0 %v409
    %448 = vmatpush.xpose.msra.mxu0 %v406
    %449 = vmatpush.xpose.msra.mxu0 %v403
    %450 = vmatpush.xpose.msra.mxu0 %v400
    %451 = vmatpush.xpose.msra.mxu0 %v397
    %452 = vmatpush.xpose.msra.mxu0 %v394
    %453 = vmatpush.xpose.msra.mxu0 %v391
    %454 = vmatpush.xpose.msra.mxu0 %v388
    %455 = vmatpush.xpose.msra.mxu0 %v385
    %456 = vmatpush.xpose.msra.mxu0 %v382
    %457 = vmatpush.xpose.msra.mxu0 %v379
    %458 = vmatpush.xpose.msra.mxu0 %v376
    %459 = vmatmul.f32.gmra.mxu0 %v325
    %v460 = vpop.f32.mrf.mxu0
    %v461 = vadd.f32 0.0, %v460
    %462 = vdwg.mxu0
    %v463 = vld [vmem:[%s4] sm:$0x3]
    %v465 = vperm.slane %v463, 0
    %v466 = vperm.slane %v463, 1
    %v469 = vadd.f32 %v465, %v323
    %v470 = vadd.f32 %v466, %v323
    %v471 = vmul.f32 %v441, 2.0
    %v472 = vmul.f32 %v461, 2.0
    %v473 = vsub.f32 %v469, %v471
    %v474 = vsub.f32 %v470, %v472
    %v475 = vmax.f32 %v473, 0.0
    %v476 = vmax.f32 %v474, 0.0
    %v477 = vrsqrt.pop %v475
    %v478 = vmul.f32 %v477, %v475
    %v479 = vmul.f32 %v478, %v477
    %v480 = vmul.f32 0.5, %v479
    %v481 = vsub.f32 1.5, %v480
    %v482 = vmul.f32 %v477, %v481
    %v483 = vmul.f32 %v475, %v482
    %vm484 = vcmp.eq.f32.partialorder %v475, inf
    %v485 = vsel %vm484, %v475, %v483
    %vm486 = vcmp.eq.f32.partialorder %v475, 0.0
    %v487 = vand.u32 %v475, 2147483648
    %v488 = vsel %vm486, %v487, %v485
    %v489 = vrsqrt.pop %v476
    %v490 = vmul.f32 %v489, %v476
    %v491 = vmul.f32 %v490, %v489
    %v492 = vmul.f32 0.5, %v491
    %v493 = vsub.f32 1.5, %v492
    %v494 = vmul.f32 %v489, %v493
    %v495 = vmul.f32 %v476, %v494
    %vm496 = vcmp.eq.f32.partialorder %v476, inf
    %v497 = vsel %vm496, %v476, %v495
    %vm498 = vcmp.eq.f32.partialorder %v476, 0.0
    %v499 = vand.u32 %v476, 2147483648
    %v500 = vsel %vm498, %v499, %v497
    %v501 = vsub.f32 0.0, %v488
    %v502 = vsub.f32 0.0, %v500
    %v503 = vmul.f32 %v501, 1.442695
    %v504 = vpow.pop %v503
    %v505 = vmul.f32 %v502, 1.442695
    %v506 = vpow.pop %v505
    %v507 = vlaneseq
    %v508 = vand.u32 %v507, 127
    %v509 = vadd.s32 %v508, 128
    %v510 = vmin.f32 %v475, %v476
    %511 = vmin.xlane.f32.xlu0 %v510
    %v512 = vpop.xlane.xlu0 %511
    %vm513 = vcmp.eq.f32.partialorder %v475, %v512
    %vm514 = vcmp.eq.f32.partialorder %v476, %v512
    %v515 = vsel %vm513, %v508, 256
    %v516 = vsel %vm514, %v509, 256
    %vm517 = vcmp.lt.s32.totalorder %v515, %v516
    %v518 = vsel %vm517, %v515, %v516
    %v519 = vand.u32 %v518, 65535
    %v520 = vshra.s32 %v518, 16
    %v521 = vcvt.s32.f32 %v519
    %v522 = vcvt.s32.f32 %v520
    %523 = vmin.xlane.f32.xlu0 %v522
    %v524 = vpop.xlane.xlu0 %523
    %vm525 = vcmp.eq.f32.partialorder %v522, %v524
    %v526 = vsel %vm525, %v521, inf
    %527 = vmin.xlane.f32.xlu0 %v526
    %v528 = vpop.xlane.xlu0 %527
    %v529 = vcvt.f32.s32 %v528
    %v530 = vcvt.f32.s32 %v524
    %v531 = vshll.u32 %v530, 16
    %v532 = vadd.s32 %v531, %v529
    %vm533 = vcmp.eq.s32.totalorder %v508, %v532
    %vm534 = vcmp.eq.s32.totalorder %v509, %v532
    %v535 = vsel %vm533, %v504, 0.0
    %v536 = vsel %vm534, %v506, 0.0
    %v537 = vadd.f32 %v535, 0.0
    %v538 = vadd.f32 %v536, 0.0
    %v539 = vsel %vm533, inf, %v475
    %v540 = vsel %vm534, inf, %v476
    %v541 = vmin.f32 %v539, %v540
    %542 = vmin.xlane.f32.xlu0 %v541
    %v543 = vpop.xlane.xlu0 %542
    %vm544 = vcmp.eq.f32.partialorder %v539, %v543
    %vm545 = vcmp.eq.f32.partialorder %v540, %v543
    %v546 = vsel %vm544, %v508, 256
    %v547 = vsel %vm545, %v509, 256
    %vm548 = vcmp.lt.s32.totalorder %v546, %v547
    %v549 = vsel %vm548, %v546, %v547
    %v550 = vand.u32 %v549, 65535
    %v551 = vshra.s32 %v549, 16
    %v552 = vcvt.s32.f32 %v550
    %v553 = vcvt.s32.f32 %v551
    %554 = vmin.xlane.f32.xlu0 %v553
    %v555 = vpop.xlane.xlu0 %554
    %vm556 = vcmp.eq.f32.partialorder %v553, %v555
    %v557 = vsel %vm556, %v552, inf
    %558 = vmin.xlane.f32.xlu0 %v557
    %v559 = vpop.xlane.xlu0 %558
    %v560 = vcvt.f32.s32 %v559
    %v561 = vcvt.f32.s32 %v555
    %v562 = vshll.u32 %v561, 16
    %v563 = vadd.s32 %v562, %v560
    %vm564 = vcmp.eq.s32.totalorder %v508, %v563
    %vm565 = vcmp.eq.s32.totalorder %v509, %v563
    %v566 = vsel %vm564, %v504, 0.0
    %v567 = vsel %vm565, %v506, 0.0
    %v568 = vadd.f32 %v537, %v566
    %v569 = vadd.f32 %v538, %v567
    %v570 = vsel %vm564, inf, %v539
    %v571 = vsel %vm565, inf, %v540
    %v572 = vmin.f32 %v570, %v571
    %573 = vmin.xlane.f32.xlu0 %v572
    %v574 = vpop.xlane.xlu0 %573
    %vm575 = vcmp.eq.f32.partialorder %v570, %v574
    %vm576 = vcmp.eq.f32.partialorder %v571, %v574
    %v577 = vsel %vm575, %v508, 256
    %v578 = vsel %vm576, %v509, 256
    %vm579 = vcmp.lt.s32.totalorder %v577, %v578
    %v580 = vsel %vm579, %v577, %v578
    %v581 = vand.u32 %v580, 65535
    %v582 = vshra.s32 %v580, 16
    %v583 = vcvt.s32.f32 %v581
    %v584 = vcvt.s32.f32 %v582
    %585 = vmin.xlane.f32.xlu0 %v584
    %v586 = vpop.xlane.xlu0 %585
    %vm587 = vcmp.eq.f32.partialorder %v584, %v586
    %v588 = vsel %vm587, %v583, inf
    %589 = vmin.xlane.f32.xlu0 %v588
    %v590 = vpop.xlane.xlu0 %589
    %v591 = vcvt.f32.s32 %v590
    %v592 = vcvt.f32.s32 %v586
    %v593 = vshll.u32 %v592, 16
    %v594 = vadd.s32 %v593, %v591
    %vm595 = vcmp.eq.s32.totalorder %v508, %v594
    %vm596 = vcmp.eq.s32.totalorder %v509, %v594
    %v597 = vsel %vm595, %v504, 0.0
    %v598 = vsel %vm596, %v506, 0.0
    %v599 = vadd.f32 %v568, %v597
    %v600 = vadd.f32 %v569, %v598
    %v601 = vsel %vm595, inf, %v570
    %v602 = vsel %vm596, inf, %v571
    %v603 = vmin.f32 %v601, %v602
    %604 = vmin.xlane.f32.xlu0 %v603
    %v605 = vpop.xlane.xlu0 %604
    %vm606 = vcmp.eq.f32.partialorder %v601, %v605
    %vm607 = vcmp.eq.f32.partialorder %v602, %v605
    %v608 = vsel %vm606, %v508, 256
    %v609 = vsel %vm607, %v509, 256
    %vm610 = vcmp.lt.s32.totalorder %v608, %v609
    %v611 = vsel %vm610, %v608, %v609
    %v612 = vand.u32 %v611, 65535
    %v613 = vshra.s32 %v611, 16
    %v614 = vcvt.s32.f32 %v612
    %v615 = vcvt.s32.f32 %v613
    %616 = vmin.xlane.f32.xlu0 %v615
    %v617 = vpop.xlane.xlu0 %616
    %vm618 = vcmp.eq.f32.partialorder %v615, %v617
    %v619 = vsel %vm618, %v614, inf
    %620 = vmin.xlane.f32.xlu0 %v619
    %v621 = vpop.xlane.xlu0 %620
    %v622 = vcvt.f32.s32 %v621
    %v623 = vcvt.f32.s32 %v617
    %v624 = vshll.u32 %v623, 16
    %v625 = vadd.s32 %v624, %v622
    %vm626 = vcmp.eq.s32.totalorder %v508, %v625
    %vm627 = vcmp.eq.s32.totalorder %v509, %v625
    %v628 = vsel %vm626, %v504, 0.0
    %v629 = vsel %vm627, %v506, 0.0
    %v630 = vadd.f32 %v599, %v628
    %v631 = vadd.f32 %v600, %v629
    %v632 = vsel %vm626, inf, %v601
    %v633 = vsel %vm627, inf, %v602
    %v634 = vmin.f32 %v632, %v633
    %635 = vmin.xlane.f32.xlu0 %v634
    %v636 = vpop.xlane.xlu0 %635
    %vm637 = vcmp.eq.f32.partialorder %v632, %v636
    %vm638 = vcmp.eq.f32.partialorder %v633, %v636
    %v639 = vsel %vm637, %v508, 256
    %v640 = vsel %vm638, %v509, 256
    %vm641 = vcmp.lt.s32.totalorder %v639, %v640
    %v642 = vsel %vm641, %v639, %v640
    %v643 = vand.u32 %v642, 65535
    %v644 = vshra.s32 %v642, 16
    %v645 = vcvt.s32.f32 %v643
    %v646 = vcvt.s32.f32 %v644
    %647 = vmin.xlane.f32.xlu0 %v646
    %v648 = vpop.xlane.xlu0 %647
    %vm649 = vcmp.eq.f32.partialorder %v646, %v648
    %v650 = vsel %vm649, %v645, inf
    %651 = vmin.xlane.f32.xlu0 %v650
    %v652 = vpop.xlane.xlu0 %651
    %v653 = vcvt.f32.s32 %v652
    %v654 = vcvt.f32.s32 %v648
    %v655 = vshll.u32 %v654, 16
    %v656 = vadd.s32 %v655, %v653
    %vm657 = vcmp.eq.s32.totalorder %v508, %v656
    %vm658 = vcmp.eq.s32.totalorder %v509, %v656
    %v659 = vsel %vm657, %v504, 0.0
    %v660 = vsel %vm658, %v506, 0.0
    %v661 = vadd.f32 %v630, %v659
    %v662 = vadd.f32 %v631, %v660
    %v663 = vsel %vm657, inf, %v632
    %v664 = vsel %vm658, inf, %v633
    %v665 = vmin.f32 %v663, %v664
    %666 = vmin.xlane.f32.xlu0 %v665
    %v667 = vpop.xlane.xlu0 %666
    %vm668 = vcmp.eq.f32.partialorder %v663, %v667
    %vm669 = vcmp.eq.f32.partialorder %v664, %v667
    %v670 = vsel %vm668, %v508, 256
    %v671 = vsel %vm669, %v509, 256
    %vm672 = vcmp.lt.s32.totalorder %v670, %v671
    %v673 = vsel %vm672, %v670, %v671
    %v674 = vand.u32 %v673, 65535
    %v675 = vshra.s32 %v673, 16
    %v676 = vcvt.s32.f32 %v674
    %v677 = vcvt.s32.f32 %v675
    %678 = vmin.xlane.f32.xlu0 %v677
    %v679 = vpop.xlane.xlu0 %678
    %vm680 = vcmp.eq.f32.partialorder %v677, %v679
    %v681 = vsel %vm680, %v676, inf
    %682 = vmin.xlane.f32.xlu0 %v681
    %v683 = vpop.xlane.xlu0 %682
    %v684 = vcvt.f32.s32 %v683
    %v685 = vcvt.f32.s32 %v679
    %v686 = vshll.u32 %v685, 16
    %v687 = vadd.s32 %v686, %v684
    %vm688 = vcmp.eq.s32.totalorder %v508, %v687
    %vm689 = vcmp.eq.s32.totalorder %v509, %v687
    %v690 = vsel %vm688, %v504, 0.0
    %v691 = vsel %vm689, %v506, 0.0
    %v692 = vadd.f32 %v661, %v690
    %v693 = vadd.f32 %v662, %v691
    %v694 = vsel %vm688, inf, %v663
    %v695 = vsel %vm689, inf, %v664
    %v696 = vmin.f32 %v694, %v695
    %697 = vmin.xlane.f32.xlu0 %v696
    %v698 = vpop.xlane.xlu0 %697
    %vm699 = vcmp.eq.f32.partialorder %v694, %v698
    %vm700 = vcmp.eq.f32.partialorder %v695, %v698
    %v701 = vsel %vm699, %v508, 256
    %v702 = vsel %vm700, %v509, 256
    %vm703 = vcmp.lt.s32.totalorder %v701, %v702
    %v704 = vsel %vm703, %v701, %v702
    %v705 = vand.u32 %v704, 65535
    %v706 = vshra.s32 %v704, 16
    %v707 = vcvt.s32.f32 %v705
    %v708 = vcvt.s32.f32 %v706
    %709 = vmin.xlane.f32.xlu0 %v708
    %v710 = vpop.xlane.xlu0 %709
    %vm711 = vcmp.eq.f32.partialorder %v708, %v710
    %v712 = vsel %vm711, %v707, inf
    %713 = vmin.xlane.f32.xlu0 %v712
    %v714 = vpop.xlane.xlu0 %713
    %v715 = vcvt.f32.s32 %v714
    %v716 = vcvt.f32.s32 %v710
    %v717 = vshll.u32 %v716, 16
    %v718 = vadd.s32 %v717, %v715
    %vm719 = vcmp.eq.s32.totalorder %v508, %v718
    %vm720 = vcmp.eq.s32.totalorder %v509, %v718
    %v721 = vsel %vm719, %v504, 0.0
    %v722 = vsel %vm720, %v506, 0.0
    %v723 = vadd.f32 %v692, %v721
    %v724 = vadd.f32 %v693, %v722
    %v725 = vsel %vm719, inf, %v694
    %v726 = vsel %vm720, inf, %v695
    %v727 = vmin.f32 %v725, %v726
    %728 = vmin.xlane.f32.xlu0 %v727
    %v729 = vpop.xlane.xlu0 %728
    %vm730 = vcmp.eq.f32.partialorder %v725, %v729
    %vm731 = vcmp.eq.f32.partialorder %v726, %v729
    %v732 = vsel %vm730, %v508, 256
    %v733 = vsel %vm731, %v509, 256
    %vm734 = vcmp.lt.s32.totalorder %v732, %v733
    %v735 = vsel %vm734, %v732, %v733
    %v736 = vand.u32 %v735, 65535
    %v737 = vshra.s32 %v735, 16
    %v738 = vcvt.s32.f32 %v736
    %v739 = vcvt.s32.f32 %v737
    %740 = vmin.xlane.f32.xlu0 %v739
    %v741 = vpop.xlane.xlu0 %740
    %vm742 = vcmp.eq.f32.partialorder %v739, %v741
    %v743 = vsel %vm742, %v738, inf
    %744 = vmin.xlane.f32.xlu0 %v743
    %v745 = vpop.xlane.xlu0 %744
    %v746 = vcvt.f32.s32 %v745
    %v747 = vcvt.f32.s32 %v741
    %v748 = vshll.u32 %v747, 16
    %v749 = vadd.s32 %v748, %v746
    %vm750 = vcmp.eq.s32.totalorder %v508, %v749
    %vm751 = vcmp.eq.s32.totalorder %v509, %v749
    %v752 = vsel %vm750, %v504, 0.0
    %v753 = vsel %vm751, %v506, 0.0
    %v754 = vadd.f32 %v723, %v752
    %v755 = vadd.f32 %v724, %v753
    %v756 = vsel %vm750, inf, %v725
    %v757 = vsel %vm751, inf, %v726
    %v758 = vmin.f32 %v756, %v757
    %759 = vmin.xlane.f32.xlu0 %v758
    %v760 = vpop.xlane.xlu0 %759
    %vm761 = vcmp.eq.f32.partialorder %v756, %v760
    %vm762 = vcmp.eq.f32.partialorder %v757, %v760
    %v763 = vsel %vm761, %v508, 256
    %v764 = vsel %vm762, %v509, 256
    %vm765 = vcmp.lt.s32.totalorder %v763, %v764
    %v766 = vsel %vm765, %v763, %v764
    %v767 = vand.u32 %v766, 65535
    %v768 = vshra.s32 %v766, 16
    %v769 = vcvt.s32.f32 %v767
    %v770 = vcvt.s32.f32 %v768
    %771 = vmin.xlane.f32.xlu0 %v770
    %v772 = vpop.xlane.xlu0 %771
    %vm773 = vcmp.eq.f32.partialorder %v770, %v772
    %v774 = vsel %vm773, %v769, inf
    %775 = vmin.xlane.f32.xlu0 %v774
    %v776 = vpop.xlane.xlu0 %775
    %v777 = vcvt.f32.s32 %v776
    %v778 = vcvt.f32.s32 %v772
    %v779 = vshll.u32 %v778, 16
    %v780 = vadd.s32 %v779, %v777
    %vm781 = vcmp.eq.s32.totalorder %v508, %v780
    %vm782 = vcmp.eq.s32.totalorder %v509, %v780
    %v783 = vsel %vm781, %v504, 0.0
    %v784 = vsel %vm782, %v506, 0.0
    %v785 = vadd.f32 %v754, %v783
    %v786 = vadd.f32 %v755, %v784
    %v787 = vsel %vm781, inf, %v756
    %v788 = vsel %vm782, inf, %v757
    %v789 = vmin.f32 %v787, %v788
    %790 = vmin.xlane.f32.xlu0 %v789
    %v791 = vpop.xlane.xlu0 %790
    %vm792 = vcmp.eq.f32.partialorder %v787, %v791
    %vm793 = vcmp.eq.f32.partialorder %v788, %v791
    %v794 = vsel %vm792, %v508, 256
    %v795 = vsel %vm793, %v509, 256
    %vm796 = vcmp.lt.s32.totalorder %v794, %v795
    %v797 = vsel %vm796, %v794, %v795
    %v798 = vand.u32 %v797, 65535
    %v799 = vshra.s32 %v797, 16
    %v800 = vcvt.s32.f32 %v798
    %v801 = vcvt.s32.f32 %v799
    %802 = vmin.xlane.f32.xlu0 %v801
    %v803 = vpop.xlane.xlu0 %802
    %vm804 = vcmp.eq.f32.partialorder %v801, %v803
    %v805 = vsel %vm804, %v800, inf
    %806 = vmin.xlane.f32.xlu0 %v805
    %v807 = vpop.xlane.xlu0 %806
    %v808 = vcvt.f32.s32 %v807
    %v809 = vcvt.f32.s32 %v803
    %v810 = vshll.u32 %v809, 16
    %v811 = vadd.s32 %v810, %v808
    %vm812 = vcmp.eq.s32.totalorder %v508, %v811
    %vm813 = vcmp.eq.s32.totalorder %v509, %v811
    %v814 = vsel %vm812, %v504, 0.0
    %v815 = vsel %vm813, %v506, 0.0
    %v816 = vadd.f32 %v785, %v814
    %v817 = vadd.f32 %v786, %v815
    %v818 = vsel %vm812, inf, %v787
    %v819 = vsel %vm813, inf, %v788
    %v820 = vmin.f32 %v818, %v819
    %821 = vmin.xlane.f32.xlu0 %v820
    %v822 = vpop.xlane.xlu0 %821
    %vm823 = vcmp.eq.f32.partialorder %v818, %v822
    %vm824 = vcmp.eq.f32.partialorder %v819, %v822
    %v825 = vsel %vm823, %v508, 256
    %v826 = vsel %vm824, %v509, 256
    %vm827 = vcmp.lt.s32.totalorder %v825, %v826
    %v828 = vsel %vm827, %v825, %v826
    %v829 = vand.u32 %v828, 65535
    %v830 = vshra.s32 %v828, 16
    %v831 = vcvt.s32.f32 %v829
    %v832 = vcvt.s32.f32 %v830
    %833 = vmin.xlane.f32.xlu0 %v832
    %v834 = vpop.xlane.xlu0 %833
    %vm835 = vcmp.eq.f32.partialorder %v832, %v834
    %v836 = vsel %vm835, %v831, inf
    %837 = vmin.xlane.f32.xlu0 %v836
    %v838 = vpop.xlane.xlu0 %837
    %v839 = vcvt.f32.s32 %v838
    %v840 = vcvt.f32.s32 %v834
    %v841 = vshll.u32 %v840, 16
    %v842 = vadd.s32 %v841, %v839
    %vm843 = vcmp.eq.s32.totalorder %v508, %v842
    %vm844 = vcmp.eq.s32.totalorder %v509, %v842
    %v845 = vsel %vm843, %v504, 0.0
    %v846 = vsel %vm844, %v506, 0.0
    %v847 = vadd.f32 %v816, %v845
    %v848 = vadd.f32 %v817, %v846
    %v849 = vsel %vm843, inf, %v818
    %v850 = vsel %vm844, inf, %v819
    %v851 = vmin.f32 %v849, %v850
    %852 = vmin.xlane.f32.xlu0 %v851
    %v853 = vpop.xlane.xlu0 %852
    %vm854 = vcmp.eq.f32.partialorder %v849, %v853
    %vm855 = vcmp.eq.f32.partialorder %v850, %v853
    %v856 = vsel %vm854, %v508, 256
    %v857 = vsel %vm855, %v509, 256
    %vm858 = vcmp.lt.s32.totalorder %v856, %v857
    %v859 = vsel %vm858, %v856, %v857
    %v860 = vand.u32 %v859, 65535
    %v861 = vshra.s32 %v859, 16
    %v862 = vcvt.s32.f32 %v860
    %v863 = vcvt.s32.f32 %v861
    %864 = vmin.xlane.f32.xlu0 %v863
    %v865 = vpop.xlane.xlu0 %864
    %vm866 = vcmp.eq.f32.partialorder %v863, %v865
    %v867 = vsel %vm866, %v862, inf
    %868 = vmin.xlane.f32.xlu0 %v867
    %v869 = vpop.xlane.xlu0 %868
    %v870 = vcvt.f32.s32 %v869
    %v871 = vcvt.f32.s32 %v865
    %v872 = vshll.u32 %v871, 16
    %v873 = vadd.s32 %v872, %v870
    %vm874 = vcmp.eq.s32.totalorder %v508, %v873
    %vm875 = vcmp.eq.s32.totalorder %v509, %v873
    %v876 = vsel %vm874, %v504, 0.0
    %v877 = vsel %vm875, %v506, 0.0
    %v878 = vadd.f32 %v847, %v876
    %v879 = vadd.f32 %v848, %v877
    %v880 = vsel %vm874, inf, %v849
    %v881 = vsel %vm875, inf, %v850
    %v882 = vmin.f32 %v880, %v881
    %883 = vmin.xlane.f32.xlu0 %v882
    %v884 = vpop.xlane.xlu0 %883
    %vm885 = vcmp.eq.f32.partialorder %v880, %v884
    %vm886 = vcmp.eq.f32.partialorder %v881, %v884
    %v887 = vsel %vm885, %v508, 256
    %v888 = vsel %vm886, %v509, 256
    %vm889 = vcmp.lt.s32.totalorder %v887, %v888
    %v890 = vsel %vm889, %v887, %v888
    %v891 = vand.u32 %v890, 65535
    %v892 = vshra.s32 %v890, 16
    %v893 = vcvt.s32.f32 %v891
    %v894 = vcvt.s32.f32 %v892
    %895 = vmin.xlane.f32.xlu0 %v894
    %v896 = vpop.xlane.xlu0 %895
    %vm897 = vcmp.eq.f32.partialorder %v894, %v896
    %v898 = vsel %vm897, %v893, inf
    %899 = vmin.xlane.f32.xlu0 %v898
    %v900 = vpop.xlane.xlu0 %899
    %v901 = vcvt.f32.s32 %v900
    %v902 = vcvt.f32.s32 %v896
    %v903 = vshll.u32 %v902, 16
    %v904 = vadd.s32 %v903, %v901
    %vm905 = vcmp.eq.s32.totalorder %v508, %v904
    %vm906 = vcmp.eq.s32.totalorder %v509, %v904
    %v907 = vsel %vm905, %v504, 0.0
    %v908 = vsel %vm906, %v506, 0.0
    %v909 = vadd.f32 %v878, %v907
    %v910 = vadd.f32 %v879, %v908
    %v911 = vsel %vm905, inf, %v880
    %v912 = vsel %vm906, inf, %v881
    %v913 = vmin.f32 %v911, %v912
    %914 = vmin.xlane.f32.xlu0 %v913
    %v915 = vpop.xlane.xlu0 %914
    %vm916 = vcmp.eq.f32.partialorder %v911, %v915
    %vm917 = vcmp.eq.f32.partialorder %v912, %v915
    %v918 = vsel %vm916, %v508, 256
    %v919 = vsel %vm917, %v509, 256
    %vm920 = vcmp.lt.s32.totalorder %v918, %v919
    %v921 = vsel %vm920, %v918, %v919
    %v922 = vand.u32 %v921, 65535
    %v923 = vshra.s32 %v921, 16
    %v924 = vcvt.s32.f32 %v922
    %v925 = vcvt.s32.f32 %v923
    %926 = vmin.xlane.f32.xlu0 %v925
    %v927 = vpop.xlane.xlu0 %926
    %vm928 = vcmp.eq.f32.partialorder %v925, %v927
    %v929 = vsel %vm928, %v924, inf
    %930 = vmin.xlane.f32.xlu0 %v929
    %v931 = vpop.xlane.xlu0 %930
    %v932 = vcvt.f32.s32 %v931
    %v933 = vcvt.f32.s32 %v927
    %v934 = vshll.u32 %v933, 16
    %v935 = vadd.s32 %v934, %v932
    %vm936 = vcmp.eq.s32.totalorder %v508, %v935
    %vm937 = vcmp.eq.s32.totalorder %v509, %v935
    %v938 = vsel %vm936, %v504, 0.0
    %v939 = vsel %vm937, %v506, 0.0
    %v940 = vadd.f32 %v909, %v938
    %v941 = vadd.f32 %v910, %v939
    %v942 = vsel %vm936, inf, %v911
    %v943 = vsel %vm937, inf, %v912
    %v944 = vmin.f32 %v942, %v943
    %945 = vmin.xlane.f32.xlu0 %v944
    %v946 = vpop.xlane.xlu0 %945
    %vm947 = vcmp.eq.f32.partialorder %v942, %v946
    %vm948 = vcmp.eq.f32.partialorder %v943, %v946
    %v949 = vsel %vm947, %v508, 256
    %v950 = vsel %vm948, %v509, 256
    %vm951 = vcmp.lt.s32.totalorder %v949, %v950
    %v952 = vsel %vm951, %v949, %v950
    %v953 = vand.u32 %v952, 65535
    %v954 = vshra.s32 %v952, 16
    %v955 = vcvt.s32.f32 %v953
    %v956 = vcvt.s32.f32 %v954
    %957 = vmin.xlane.f32.xlu0 %v956
    %v958 = vpop.xlane.xlu0 %957
    %vm959 = vcmp.eq.f32.partialorder %v956, %v958
    %v960 = vsel %vm959, %v955, inf
    %961 = vmin.xlane.f32.xlu0 %v960
    %v962 = vpop.xlane.xlu0 %961
    %v963 = vcvt.f32.s32 %v962
    %v964 = vcvt.f32.s32 %v958
    %v965 = vshll.u32 %v964, 16
    %v966 = vadd.s32 %v965, %v963
    %vm967 = vcmp.eq.s32.totalorder %v508, %v966
    %vm968 = vcmp.eq.s32.totalorder %v509, %v966
    %v969 = vsel %vm967, %v504, 0.0
    %v970 = vsel %vm968, %v506, 0.0
    %v971 = vadd.f32 %v940, %v969
    %v972 = vadd.f32 %v941, %v970
    %v973 = vld [vmem:[%s5] sm:$0xff]
    %v974 = vld [vmem:[%s5 + $0x8] sm:$0xff]
    %v975 = vld [vmem:[%s5 + $0x10] sm:$0xff]
    %v976 = vld [vmem:[%s5 + $0x18] sm:$0xff]
    %v977 = vld [vmem:[%s5 + $0x20] sm:$0xff]
    %v978 = vld [vmem:[%s5 + $0x28] sm:$0xff]
    %v979 = vld [vmem:[%s5 + $0x30] sm:$0xff]
    %v980 = vld [vmem:[%s5 + $0x38] sm:$0xff]
    %v981 = vld [vmem:[%s5 + $0x40] sm:$0xff]
    %v982 = vld [vmem:[%s5 + $0x48] sm:$0xff]
    %v983 = vld [vmem:[%s5 + $0x50] sm:$0xff]
    %v984 = vld [vmem:[%s5 + $0x58] sm:$0xff]
    %v985 = vld [vmem:[%s5 + $0x60] sm:$0xff]
    %v986 = vld [vmem:[%s5 + $0x68] sm:$0xff]
    %v987 = vld [vmem:[%s5 + $0x70] sm:$0xff]
    %v988 = vld [vmem:[%s5 + $0x78] sm:$0xff]
    %v989 = vld [vmem:[%s5 + $0x80] sm:$0xff]
    %v990 = vld [vmem:[%s5 + $0x88] sm:$0xff]
    %v991 = vld [vmem:[%s5 + $0x90] sm:$0xff]
    %v992 = vld [vmem:[%s5 + $0x98] sm:$0xff]
    %v993 = vld [vmem:[%s5 + $0xa0] sm:$0xff]
    %v994 = vld [vmem:[%s5 + $0xa8] sm:$0xff]
    %v995 = vld [vmem:[%s5 + $0xb0] sm:$0xff]
    %v996 = vld [vmem:[%s5 + $0xb8] sm:$0xff]
    %v997 = vld [vmem:[%s5 + $0xc0] sm:$0xff]
    %v998 = vld [vmem:[%s5 + $0xc8] sm:$0xff]
    %v999 = vld [vmem:[%s5 + $0xd0] sm:$0xff]
    %v1000 = vld [vmem:[%s5 + $0xd8] sm:$0xff]
    %v1001 = vld [vmem:[%s5 + $0xe0] sm:$0xff]
    %v1002 = vld [vmem:[%s5 + $0xe8] sm:$0xff]
    %v1003 = vld [vmem:[%s5 + $0xf0] sm:$0xff]
    %v1004 = vld [vmem:[%s5 + $0xf8] sm:$0xff]
    %1005 = vmatpush.msra.mxu0 %v988
    %1006 = vmatpush.msra.mxu0 %v987
    %1007 = vmatpush.msra.mxu0 %v986
    %1008 = vmatpush.msra.mxu0 %v985
    %1009 = vmatpush.msra.mxu0 %v984
    %1010 = vmatpush.msra.mxu0 %v983
    %1011 = vmatpush.msra.mxu0 %v982
    %1012 = vmatpush.msra.mxu0 %v981
    %1013 = vmatpush.msra.mxu0 %v980
    %1014 = vmatpush.msra.mxu0 %v979
    %1015 = vmatpush.msra.mxu0 %v978
    %1016 = vmatpush.msra.mxu0 %v977
    %1017 = vmatpush.msra.mxu0 %v976
    %1018 = vmatpush.msra.mxu0 %v975
    %1019 = vmatpush.msra.mxu0 %v974
    %1020 = vmatpush.msra.mxu0 %v973
    %1021 = vmatmul.f32.gmra.mxu0 %v971
    %v1022 = vpop.f32.mrf.mxu0
    %v1023 = vadd.f32 0.0, %v1022
    %1024 = vdwg.mxu0
    %1025 = vmatpush.msra.mxu0 %v1004
    %1026 = vmatpush.msra.mxu0 %v1003
    %1027 = vmatpush.msra.mxu0 %v1002
    %1028 = vmatpush.msra.mxu0 %v1001
    %1029 = vmatpush.msra.mxu0 %v1000
    %1030 = vmatpush.msra.mxu0 %v999
    %1031 = vmatpush.msra.mxu0 %v998
    %1032 = vmatpush.msra.mxu0 %v997
    %1033 = vmatpush.msra.mxu0 %v996
    %1034 = vmatpush.msra.mxu0 %v995
    %1035 = vmatpush.msra.mxu0 %v994
    %1036 = vmatpush.msra.mxu0 %v993
    %1037 = vmatpush.msra.mxu0 %v992
    %1038 = vmatpush.msra.mxu0 %v991
    %1039 = vmatpush.msra.mxu0 %v990
    %1040 = vmatpush.msra.mxu0 %v989
    %1041 = vmatmul.f32.gmra.mxu0 %v972
    %v1042 = vpop.f32.mrf.mxu0
    %v1043 = vadd.f32 %v1023, %v1042
    %1044 = vdwg.mxu0
    %v1045 = vlog2.pop %v1043
    %v1046 = vmul.f32 %v1045, 0.6931472
    %vm1047 = vcmask 80896
    %1048 = vst.msk [vmem:[#allocation2] sm:$0xff] %vm1047, %v1046
    // Predicated region
    $region26: #{tpu_custom_call.1} parent=1 // pred_check
      _
    $region27: #{tpu_custom_call.1} parent=1 // pred_check_branch
      %1050 = sbr.rel (0) target = $region29
    $region28: #{tpu_custom_call.1} parent=1 // pred_region
      %1052 = vsyncadd [#allocation3], 0
      %s1054 = sshll.u32 [#allocation2], 4
      %s1055 = int_to_ptr.vmem [resolvable:$true] %s1054
      %s1056 = sshll.u32 %s6, 4
      %s1057 = int_to_ptr.hbm [resolvable:$true] %s1056
      %1059 = dma.vmem_to_hbm [thread:$0]  %s1055, 128, %s1057, [#allocation3]
    $region29: #{tpu_custom_call.1} parent=1 // pred_fallthru
      _
    // Predicated region
    $region30: #{tpu_custom_call.1} parent=1 // pred_check
      _
    $region31: #{tpu_custom_call.1} parent=1 // pred_check_branch
      %1061 = sbr.rel (0) target = $region33
    $region32: #{tpu_custom_call.1} parent=1 // pred_region
      %1063 = dma.done [#allocation3], 128
    $region33: #{tpu_custom_call.1} parent=1 // pred_fallthru
      _
    %1064 = vsyncpa [#allocation3], 1

</llo_original>
